<compile_context>
chip_gen: v7x
topology: tpu7x:2x2x1
jax: 0.10.0
libtpu: 0.0.40
codegen_flags: <defaults>
</compile_context>

<pallas_src>
import functools

import jax
import jax.numpy as jnp
from jax.experimental import pallas as pl
from jax.experimental.pallas import tpu as pltpu


# ----------------------------------------------------------------------------
# Layer geometry (out_features, in_features), PyTorch nn.Linear layout.
# ----------------------------------------------------------------------------
LAYER_DIMS = ((6, 4), (8, 6), (4, 8), (4, 4), (2, 4))
IN_DIM = LAYER_DIMS[0][1]    # 4
OUT_DIM = LAYER_DIMS[-1][0]  # 2

# Flat offsets into the packed parameter buffer: all weights first, then biases.
_W_OFFS = []
_off = 0
for _o, _i in LAYER_DIMS:
    _W_OFFS.append(_off)
    _off += _o * _i
_B_OFFS = []
for _o, _i in LAYER_DIMS:
    _B_OFFS.append(_off)
    _off += _o
N_PARAMS = _off  # 152


def _round_up(n, m):
    return ((n + m - 1) // m) * m


# ----------------------------------------------------------------------------
# Kernel: params in SMEM (scalars), x block (4, TB) in VMEM, out block (2, TB).
# ----------------------------------------------------------------------------
def simple_nn_kernel(params_ref, x_ref, o_ref):
    def dense(rows, layer_idx):
        """rows: list of (1, TB) feature rows. Returns list of (1, TB) rows."""
        out_d, in_d = LAYER_DIMS[layer_idx]
        w0, b0 = _W_OFFS[layer_idx], _B_OFFS[layer_idx]
        outs = []
        for i in range(out_d):
            acc = params_ref[w0 + i * in_d] * rows[0]
            for k in range(1, in_d):
                acc = acc + params_ref[w0 + i * in_d + k] * rows[k]
            outs.append(acc + params_ref[b0 + i])
        return outs

    # Load input rows (feature-major: 4 rows of (1, TB)).
    rows = [x_ref[k:k + 1, :] for k in range(IN_DIM)]

    # fc1 + LeakyReLU(0.01)
    rows = [jnp.where(r >= 0.0, r, 0.01 * r) for r in dense(rows, 0)]
    # fc2 + tanh
    rows = [jnp.tanh(r) for r in dense(rows, 1)]
    # fc3 + sigmoid
    rows = [jax.nn.sigmoid(r) for r in dense(rows, 2)]
    # fc4 + ELU(alpha=1.0)
    rows = [jnp.where(r > 0.0, r, jnp.exp(r) - 1.0) for r in dense(rows, 3)]

    # fc5 + 2-class softmax over the feature axis (pure elementwise, no XLU).
    l0, l1 = dense(rows, 4)
    m = jnp.maximum(l0, l1)
    e0 = jnp.exp(l0 - m)
    e1 = jnp.exp(l1 - m)
    inv = 1.0 / (e0 + e1)   # exact divide to keep 1e-5 tolerance
    o_ref[0:1, :] = e0 * inv
    o_ref[1:2, :] = e1 * inv


# ----------------------------------------------------------------------------
# Host-side wrapper.
# ----------------------------------------------------------------------------
def pack_params(params):
    """Pack [(W(out,in), b(out,))...] into one flat f32 buffer (weights, biases)."""
    ws = [w.reshape(-1).astype(jnp.float32) for (w, _) in params]
    bs = [b.reshape(-1).astype(jnp.float32) for (_, b) in params]
    return jnp.concatenate(ws + bs)


@functools.partial(jax.jit, static_argnames=("tb",))
def simple_nn_forward(x, params, *, tb=512):
    """x: (B, 4) f32, params: list of (W(out,in), b(out,)).  Returns (B, 2)."""
    B = x.shape[0]
    packed = pack_params(params)

    # Lane-dense batch tile: multiple of 128, capped at `tb` (sized so the
    # double-buffered tiles stay tiny even under v7x's 64 MiB VMEM).
    TB = min(tb, _round_up(B, 128))
    Bp = _round_up(B, TB)

    # Feature-major input, zero-padded along batch to a multiple of TB.
    xt = jnp.zeros((IN_DIM, Bp), jnp.float32).at[:, :B].set(
        x.astype(jnp.float32).T)

    out_t = pl.pallas_call(
        simple_nn_kernel,
        out_shape=jax.ShapeDtypeStruct((OUT_DIM, Bp), jnp.float32),
        grid=(Bp // TB,),
        in_specs=[
            pl.BlockSpec(memory_space=pltpu.MemorySpace.SMEM),      # packed params
            pl.BlockSpec((IN_DIM, TB), lambda i: (0, i)),           # x tile
        ],
        out_specs=pl.BlockSpec((OUT_DIM, TB), lambda i: (0, i)),    # out tile
        compiler_params=pltpu.CompilerParams(
            dimension_semantics=("parallel",)),
    )(packed, xt)

    return out_t[:, :B].T


# ----------------------------------------------------------------------------
# Params / reference.
# ----------------------------------------------------------------------------
def init_params(key):
    """PyTorch nn.Linear default init: U(-1/sqrt(fan_in), 1/sqrt(fan_in))."""
    params = []
    for (fan_out, fan_in) in LAYER_DIMS:
        key, kw, kb = jax.random.split(key, 3)
        bound = 1.0 / (fan_in ** 0.5)
        w = jax.random.uniform(kw, (fan_out, fan_in), jnp.float32, -bound, bound)
        b = jax.random.uniform(kb, (fan_out,), jnp.float32, -bound, bound)
        params.append((w, b))
    return params


def reference_forward(x, params):
    """Pure-JAX reference of the PyTorch forward pass (batch-major)."""
    (w1, b1), (w2, b2), (w3, b3), (w4, b4), (w5, b5) = params
    h = x @ w1.T + b1
    h = jnp.where(h >= 0, h, 0.01 * h)
    h = jnp.tanh(h @ w2.T + b2)
    h = jax.nn.sigmoid(h @ w3.T + b3)
    h = h @ w4.T + b4
    h = jnp.where(h > 0, h, jnp.exp(h) - 1.0)
    h = h @ w5.T + b5
    return jax.nn.softmax(h, axis=1)


if __name__ == "__main__":
    key = jax.random.PRNGKey(0)
    key, kx = jax.random.split(key)
    params = init_params(key)

    # Small batch (single grid step, padded to one 128-lane tile).
    B = 8
    x = jax.random.normal(kx, (B, IN_DIM), jnp.float32)
    out = jax.block_until_ready(simple_nn_forward(x, params))
    ref = reference_forward(x, params)
    assert out.shape == (B, OUT_DIM)
    assert jnp.allclose(out, ref, atol=1e-5, rtol=1e-5)
    assert jnp.allclose(jnp.sum(out, axis=1), jnp.ones((B,)), atol=1e-5)

    # Exercise the multi-step batch grid + padding path.
    key, kx2 = jax.random.split(key)
    B2 = 200
    x2 = jax.random.normal(kx2, (B2, IN_DIM), jnp.float32)
    out2 = jax.block_until_ready(simple_nn_forward(x2, params, tb=128))
    ref2 = reference_forward(x2, params)
    assert out2.shape == (B2, OUT_DIM)
    assert jnp.allclose(out2, ref2, atol=1e-5, rtol=1e-5)

    print("KERNEL_OK")
</pallas_src>

<mosaic_0001>
module attributes {stable_mosaic.version = 11 : i64} {
  func.func @simple_nn_kernel(%arg0: i32, %arg1: memref<152xf32, #tpu.memory_space<smem>>, %arg2: memref<4x128xf32, #tpu.memory_space<vmem>>, %arg3: memref<2x128xf32, #tpu.memory_space<vmem>>) attributes {dimension_semantics = [#tpu.dimension_semantics<parallel>], iteration_bounds = array<i64: 1>, scalar_prefetch = 0 : i64, scratch_operands = 0 : i64, tpu.core_type = #tpu.core_type<tc>, window_params = [{transform_indices = @transform_0, window_bounds = array<i64: 152>}, {transform_indices = @transform_1, window_bounds = array<i64: 4, 128>}, {transform_indices = @transform_2, window_bounds = array<i64: 2, 128>}]} {
    %c0 = arith.constant 0 : index
    %c0_0 = arith.constant 0 : index
    %0 = vector.load %arg2[%c0, %c0_0] : memref<4x128xf32, #tpu.memory_space<vmem>>, vector<1x128xf32>
    %c1 = arith.constant 1 : index
    %c0_1 = arith.constant 0 : index
    %1 = vector.load %arg2[%c1, %c0_1] : memref<4x128xf32, #tpu.memory_space<vmem>>, vector<1x128xf32>
    %c2 = arith.constant 2 : index
    %c0_2 = arith.constant 0 : index
    %2 = vector.load %arg2[%c2, %c0_2] : memref<4x128xf32, #tpu.memory_space<vmem>>, vector<1x128xf32>
    %c3 = arith.constant 3 : index
    %c0_3 = arith.constant 0 : index
    %3 = vector.load %arg2[%c3, %c0_3] : memref<4x128xf32, #tpu.memory_space<vmem>>, vector<1x128xf32>
    %c0_4 = arith.constant 0 : index
    %4 = memref.load %arg1[%c0_4] : memref<152xf32, #tpu.memory_space<smem>>
    %5 = vector.broadcast %4 : f32 to vector<1x128xf32>
    %6 = arith.mulf %5, %0 : vector<1x128xf32>
    %c1_5 = arith.constant 1 : index
    %7 = memref.load %arg1[%c1_5] : memref<152xf32, #tpu.memory_space<smem>>
    %8 = vector.broadcast %7 : f32 to vector<1x128xf32>
    %9 = arith.mulf %8, %1 : vector<1x128xf32>
    %10 = arith.addf %6, %9 : vector<1x128xf32>
    %c2_6 = arith.constant 2 : index
    %11 = memref.load %arg1[%c2_6] : memref<152xf32, #tpu.memory_space<smem>>
    %12 = vector.broadcast %11 : f32 to vector<1x128xf32>
    %13 = arith.mulf %12, %2 : vector<1x128xf32>
    %14 = arith.addf %10, %13 : vector<1x128xf32>
    %c3_7 = arith.constant 3 : index
    %15 = memref.load %arg1[%c3_7] : memref<152xf32, #tpu.memory_space<smem>>
    %16 = vector.broadcast %15 : f32 to vector<1x128xf32>
    %17 = arith.mulf %16, %3 : vector<1x128xf32>
    %18 = arith.addf %14, %17 : vector<1x128xf32>
    %c128 = arith.constant 128 : index
    %19 = memref.load %arg1[%c128] : memref<152xf32, #tpu.memory_space<smem>>
    %20 = vector.broadcast %19 : f32 to vector<1x128xf32>
    %21 = arith.addf %18, %20 : vector<1x128xf32>
    %c4 = arith.constant 4 : index
    %22 = memref.load %arg1[%c4] : memref<152xf32, #tpu.memory_space<smem>>
    %23 = vector.broadcast %22 : f32 to vector<1x128xf32>
    %24 = arith.mulf %23, %0 : vector<1x128xf32>
    %c5 = arith.constant 5 : index
    %25 = memref.load %arg1[%c5] : memref<152xf32, #tpu.memory_space<smem>>
    %26 = vector.broadcast %25 : f32 to vector<1x128xf32>
    %27 = arith.mulf %26, %1 : vector<1x128xf32>
    %28 = arith.addf %24, %27 : vector<1x128xf32>
    %c6 = arith.constant 6 : index
    %29 = memref.load %arg1[%c6] : memref<152xf32, #tpu.memory_space<smem>>
    %30 = vector.broadcast %29 : f32 to vector<1x128xf32>
    %31 = arith.mulf %30, %2 : vector<1x128xf32>
    %32 = arith.addf %28, %31 : vector<1x128xf32>
    %c7 = arith.constant 7 : index
    %33 = memref.load %arg1[%c7] : memref<152xf32, #tpu.memory_space<smem>>
    %34 = vector.broadcast %33 : f32 to vector<1x128xf32>
    %35 = arith.mulf %34, %3 : vector<1x128xf32>
    %36 = arith.addf %32, %35 : vector<1x128xf32>
    %c129 = arith.constant 129 : index
    %37 = memref.load %arg1[%c129] : memref<152xf32, #tpu.memory_space<smem>>
    %38 = vector.broadcast %37 : f32 to vector<1x128xf32>
    %39 = arith.addf %36, %38 : vector<1x128xf32>
    %c8 = arith.constant 8 : index
    %40 = memref.load %arg1[%c8] : memref<152xf32, #tpu.memory_space<smem>>
    %41 = vector.broadcast %40 : f32 to vector<1x128xf32>
    %42 = arith.mulf %41, %0 : vector<1x128xf32>
    %c9 = arith.constant 9 : index
    %43 = memref.load %arg1[%c9] : memref<152xf32, #tpu.memory_space<smem>>
    %44 = vector.broadcast %43 : f32 to vector<1x128xf32>
    %45 = arith.mulf %44, %1 : vector<1x128xf32>
    %46 = arith.addf %42, %45 : vector<1x128xf32>
    %c10 = arith.constant 10 : index
    %47 = memref.load %arg1[%c10] : memref<152xf32, #tpu.memory_space<smem>>
    %48 = vector.broadcast %47 : f32 to vector<1x128xf32>
    %49 = arith.mulf %48, %2 : vector<1x128xf32>
    %50 = arith.addf %46, %49 : vector<1x128xf32>
    %c11 = arith.constant 11 : index
    %51 = memref.load %arg1[%c11] : memref<152xf32, #tpu.memory_space<smem>>
    %52 = vector.broadcast %51 : f32 to vector<1x128xf32>
    %53 = arith.mulf %52, %3 : vector<1x128xf32>
    %54 = arith.addf %50, %53 : vector<1x128xf32>
    %c130 = arith.constant 130 : index
    %55 = memref.load %arg1[%c130] : memref<152xf32, #tpu.memory_space<smem>>
    %56 = vector.broadcast %55 : f32 to vector<1x128xf32>
    %57 = arith.addf %54, %56 : vector<1x128xf32>
    %c12 = arith.constant 12 : index
    %58 = memref.load %arg1[%c12] : memref<152xf32, #tpu.memory_space<smem>>
    %59 = vector.broadcast %58 : f32 to vector<1x128xf32>
    %60 = arith.mulf %59, %0 : vector<1x128xf32>
    %c13 = arith.constant 13 : index
    %61 = memref.load %arg1[%c13] : memref<152xf32, #tpu.memory_space<smem>>
    %62 = vector.broadcast %61 : f32 to vector<1x128xf32>
    %63 = arith.mulf %62, %1 : vector<1x128xf32>
    %64 = arith.addf %60, %63 : vector<1x128xf32>
    %c14 = arith.constant 14 : index
    %65 = memref.load %arg1[%c14] : memref<152xf32, #tpu.memory_space<smem>>
    %66 = vector.broadcast %65 : f32 to vector<1x128xf32>
    %67 = arith.mulf %66, %2 : vector<1x128xf32>
    %68 = arith.addf %64, %67 : vector<1x128xf32>
    %c15 = arith.constant 15 : index
    %69 = memref.load %arg1[%c15] : memref<152xf32, #tpu.memory_space<smem>>
    %70 = vector.broadcast %69 : f32 to vector<1x128xf32>
    %71 = arith.mulf %70, %3 : vector<1x128xf32>
    %72 = arith.addf %68, %71 : vector<1x128xf32>
    %c131 = arith.constant 131 : index
    %73 = memref.load %arg1[%c131] : memref<152xf32, #tpu.memory_space<smem>>
    %74 = vector.broadcast %73 : f32 to vector<1x128xf32>
    %75 = arith.addf %72, %74 : vector<1x128xf32>
    %c16 = arith.constant 16 : index
    %76 = memref.load %arg1[%c16] : memref<152xf32, #tpu.memory_space<smem>>
    %77 = vector.broadcast %76 : f32 to vector<1x128xf32>
    %78 = arith.mulf %77, %0 : vector<1x128xf32>
    %c17 = arith.constant 17 : index
    %79 = memref.load %arg1[%c17] : memref<152xf32, #tpu.memory_space<smem>>
    %80 = vector.broadcast %79 : f32 to vector<1x128xf32>
    %81 = arith.mulf %80, %1 : vector<1x128xf32>
    %82 = arith.addf %78, %81 : vector<1x128xf32>
    %c18 = arith.constant 18 : index
    %83 = memref.load %arg1[%c18] : memref<152xf32, #tpu.memory_space<smem>>
    %84 = vector.broadcast %83 : f32 to vector<1x128xf32>
    %85 = arith.mulf %84, %2 : vector<1x128xf32>
    %86 = arith.addf %82, %85 : vector<1x128xf32>
    %c19 = arith.constant 19 : index
    %87 = memref.load %arg1[%c19] : memref<152xf32, #tpu.memory_space<smem>>
    %88 = vector.broadcast %87 : f32 to vector<1x128xf32>
    %89 = arith.mulf %88, %3 : vector<1x128xf32>
    %90 = arith.addf %86, %89 : vector<1x128xf32>
    %c132 = arith.constant 132 : index
    %91 = memref.load %arg1[%c132] : memref<152xf32, #tpu.memory_space<smem>>
    %92 = vector.broadcast %91 : f32 to vector<1x128xf32>
    %93 = arith.addf %90, %92 : vector<1x128xf32>
    %c20 = arith.constant 20 : index
    %94 = memref.load %arg1[%c20] : memref<152xf32, #tpu.memory_space<smem>>
    %95 = vector.broadcast %94 : f32 to vector<1x128xf32>
    %96 = arith.mulf %95, %0 : vector<1x128xf32>
    %c21 = arith.constant 21 : index
    %97 = memref.load %arg1[%c21] : memref<152xf32, #tpu.memory_space<smem>>
    %98 = vector.broadcast %97 : f32 to vector<1x128xf32>
    %99 = arith.mulf %98, %1 : vector<1x128xf32>
    %100 = arith.addf %96, %99 : vector<1x128xf32>
    %c22 = arith.constant 22 : index
    %101 = memref.load %arg1[%c22] : memref<152xf32, #tpu.memory_space<smem>>
    %102 = vector.broadcast %101 : f32 to vector<1x128xf32>
    %103 = arith.mulf %102, %2 : vector<1x128xf32>
    %104 = arith.addf %100, %103 : vector<1x128xf32>
    %c23 = arith.constant 23 : index
    %105 = memref.load %arg1[%c23] : memref<152xf32, #tpu.memory_space<smem>>
    %106 = vector.broadcast %105 : f32 to vector<1x128xf32>
    %107 = arith.mulf %106, %3 : vector<1x128xf32>
    %108 = arith.addf %104, %107 : vector<1x128xf32>
    %c133 = arith.constant 133 : index
    %109 = memref.load %arg1[%c133] : memref<152xf32, #tpu.memory_space<smem>>
    %110 = vector.broadcast %109 : f32 to vector<1x128xf32>
    %111 = arith.addf %108, %110 : vector<1x128xf32>
    %cst = arith.constant 0.000000e+00 : f32
    %112 = vector.broadcast %cst : f32 to vector<1x128xf32>
    %113 = arith.cmpf oge, %21, %112 : vector<1x128xf32>
    %cst_8 = arith.constant 0.00999999977 : f32
    %114 = vector.broadcast %cst_8 : f32 to vector<1x128xf32>
    %115 = arith.mulf %114, %21 : vector<1x128xf32>
    %116 = arith.select %113, %21, %115 : vector<1x128xi1>, vector<1x128xf32>
    %cst_9 = arith.constant 0.000000e+00 : f32
    %117 = vector.broadcast %cst_9 : f32 to vector<1x128xf32>
    %118 = arith.cmpf oge, %39, %117 : vector<1x128xf32>
    %cst_10 = arith.constant 0.00999999977 : f32
    %119 = vector.broadcast %cst_10 : f32 to vector<1x128xf32>
    %120 = arith.mulf %119, %39 : vector<1x128xf32>
    %121 = arith.select %118, %39, %120 : vector<1x128xi1>, vector<1x128xf32>
    %cst_11 = arith.constant 0.000000e+00 : f32
    %122 = vector.broadcast %cst_11 : f32 to vector<1x128xf32>
    %123 = arith.cmpf oge, %57, %122 : vector<1x128xf32>
    %cst_12 = arith.constant 0.00999999977 : f32
    %124 = vector.broadcast %cst_12 : f32 to vector<1x128xf32>
    %125 = arith.mulf %124, %57 : vector<1x128xf32>
    %126 = arith.select %123, %57, %125 : vector<1x128xi1>, vector<1x128xf32>
    %cst_13 = arith.constant 0.000000e+00 : f32
    %127 = vector.broadcast %cst_13 : f32 to vector<1x128xf32>
    %128 = arith.cmpf oge, %75, %127 : vector<1x128xf32>
    %cst_14 = arith.constant 0.00999999977 : f32
    %129 = vector.broadcast %cst_14 : f32 to vector<1x128xf32>
    %130 = arith.mulf %129, %75 : vector<1x128xf32>
    %131 = arith.select %128, %75, %130 : vector<1x128xi1>, vector<1x128xf32>
    %cst_15 = arith.constant 0.000000e+00 : f32
    %132 = vector.broadcast %cst_15 : f32 to vector<1x128xf32>
    %133 = arith.cmpf oge, %93, %132 : vector<1x128xf32>
    %cst_16 = arith.constant 0.00999999977 : f32
    %134 = vector.broadcast %cst_16 : f32 to vector<1x128xf32>
    %135 = arith.mulf %134, %93 : vector<1x128xf32>
    %136 = arith.select %133, %93, %135 : vector<1x128xi1>, vector<1x128xf32>
    %cst_17 = arith.constant 0.000000e+00 : f32
    %137 = vector.broadcast %cst_17 : f32 to vector<1x128xf32>
    %138 = arith.cmpf oge, %111, %137 : vector<1x128xf32>
    %cst_18 = arith.constant 0.00999999977 : f32
    %139 = vector.broadcast %cst_18 : f32 to vector<1x128xf32>
    %140 = arith.mulf %139, %111 : vector<1x128xf32>
    %141 = arith.select %138, %111, %140 : vector<1x128xi1>, vector<1x128xf32>
    %c24 = arith.constant 24 : index
    %142 = memref.load %arg1[%c24] : memref<152xf32, #tpu.memory_space<smem>>
    %143 = vector.broadcast %142 : f32 to vector<1x128xf32>
    %144 = arith.mulf %143, %116 : vector<1x128xf32>
    %c25 = arith.constant 25 : index
    %145 = memref.load %arg1[%c25] : memref<152xf32, #tpu.memory_space<smem>>
    %146 = vector.broadcast %145 : f32 to vector<1x128xf32>
    %147 = arith.mulf %146, %121 : vector<1x128xf32>
    %148 = arith.addf %144, %147 : vector<1x128xf32>
    %c26 = arith.constant 26 : index
    %149 = memref.load %arg1[%c26] : memref<152xf32, #tpu.memory_space<smem>>
    %150 = vector.broadcast %149 : f32 to vector<1x128xf32>
    %151 = arith.mulf %150, %126 : vector<1x128xf32>
    %152 = arith.addf %148, %151 : vector<1x128xf32>
    %c27 = arith.constant 27 : index
    %153 = memref.load %arg1[%c27] : memref<152xf32, #tpu.memory_space<smem>>
    %154 = vector.broadcast %153 : f32 to vector<1x128xf32>
    %155 = arith.mulf %154, %131 : vector<1x128xf32>
    %156 = arith.addf %152, %155 : vector<1x128xf32>
    %c28 = arith.constant 28 : index
    %157 = memref.load %arg1[%c28] : memref<152xf32, #tpu.memory_space<smem>>
    %158 = vector.broadcast %157 : f32 to vector<1x128xf32>
    %159 = arith.mulf %158, %136 : vector<1x128xf32>
    %160 = arith.addf %156, %159 : vector<1x128xf32>
    %c29 = arith.constant 29 : index
    %161 = memref.load %arg1[%c29] : memref<152xf32, #tpu.memory_space<smem>>
    %162 = vector.broadcast %161 : f32 to vector<1x128xf32>
    %163 = arith.mulf %162, %141 : vector<1x128xf32>
    %164 = arith.addf %160, %163 : vector<1x128xf32>
    %c134 = arith.constant 134 : index
    %165 = memref.load %arg1[%c134] : memref<152xf32, #tpu.memory_space<smem>>
    %166 = vector.broadcast %165 : f32 to vector<1x128xf32>
    %167 = arith.addf %164, %166 : vector<1x128xf32>
    %c30 = arith.constant 30 : index
    %168 = memref.load %arg1[%c30] : memref<152xf32, #tpu.memory_space<smem>>
    %169 = vector.broadcast %168 : f32 to vector<1x128xf32>
    %170 = arith.mulf %169, %116 : vector<1x128xf32>
    %c31 = arith.constant 31 : index
    %171 = memref.load %arg1[%c31] : memref<152xf32, #tpu.memory_space<smem>>
    %172 = vector.broadcast %171 : f32 to vector<1x128xf32>
    %173 = arith.mulf %172, %121 : vector<1x128xf32>
    %174 = arith.addf %170, %173 : vector<1x128xf32>
    %c32 = arith.constant 32 : index
    %175 = memref.load %arg1[%c32] : memref<152xf32, #tpu.memory_space<smem>>
    %176 = vector.broadcast %175 : f32 to vector<1x128xf32>
    %177 = arith.mulf %176, %126 : vector<1x128xf32>
    %178 = arith.addf %174, %177 : vector<1x128xf32>
    %c33 = arith.constant 33 : index
    %179 = memref.load %arg1[%c33] : memref<152xf32, #tpu.memory_space<smem>>
    %180 = vector.broadcast %179 : f32 to vector<1x128xf32>
    %181 = arith.mulf %180, %131 : vector<1x128xf32>
    %182 = arith.addf %178, %181 : vector<1x128xf32>
    %c34 = arith.constant 34 : index
    %183 = memref.load %arg1[%c34] : memref<152xf32, #tpu.memory_space<smem>>
    %184 = vector.broadcast %183 : f32 to vector<1x128xf32>
    %185 = arith.mulf %184, %136 : vector<1x128xf32>
    %186 = arith.addf %182, %185 : vector<1x128xf32>
    %c35 = arith.constant 35 : index
    %187 = memref.load %arg1[%c35] : memref<152xf32, #tpu.memory_space<smem>>
    %188 = vector.broadcast %187 : f32 to vector<1x128xf32>
    %189 = arith.mulf %188, %141 : vector<1x128xf32>
    %190 = arith.addf %186, %189 : vector<1x128xf32>
    %c135 = arith.constant 135 : index
    %191 = memref.load %arg1[%c135] : memref<152xf32, #tpu.memory_space<smem>>
    %192 = vector.broadcast %191 : f32 to vector<1x128xf32>
    %193 = arith.addf %190, %192 : vector<1x128xf32>
    %c36 = arith.constant 36 : index
    %194 = memref.load %arg1[%c36] : memref<152xf32, #tpu.memory_space<smem>>
    %195 = vector.broadcast %194 : f32 to vector<1x128xf32>
    %196 = arith.mulf %195, %116 : vector<1x128xf32>
    %c37 = arith.constant 37 : index
    %197 = memref.load %arg1[%c37] : memref<152xf32, #tpu.memory_space<smem>>
    %198 = vector.broadcast %197 : f32 to vector<1x128xf32>
    %199 = arith.mulf %198, %121 : vector<1x128xf32>
    %200 = arith.addf %196, %199 : vector<1x128xf32>
    %c38 = arith.constant 38 : index
    %201 = memref.load %arg1[%c38] : memref<152xf32, #tpu.memory_space<smem>>
    %202 = vector.broadcast %201 : f32 to vector<1x128xf32>
    %203 = arith.mulf %202, %126 : vector<1x128xf32>
    %204 = arith.addf %200, %203 : vector<1x128xf32>
    %c39 = arith.constant 39 : index
    %205 = memref.load %arg1[%c39] : memref<152xf32, #tpu.memory_space<smem>>
    %206 = vector.broadcast %205 : f32 to vector<1x128xf32>
    %207 = arith.mulf %206, %131 : vector<1x128xf32>
    %208 = arith.addf %204, %207 : vector<1x128xf32>
    %c40 = arith.constant 40 : index
    %209 = memref.load %arg1[%c40] : memref<152xf32, #tpu.memory_space<smem>>
    %210 = vector.broadcast %209 : f32 to vector<1x128xf32>
    %211 = arith.mulf %210, %136 : vector<1x128xf32>
    %212 = arith.addf %208, %211 : vector<1x128xf32>
    %c41 = arith.constant 41 : index
    %213 = memref.load %arg1[%c41] : memref<152xf32, #tpu.memory_space<smem>>
    %214 = vector.broadcast %213 : f32 to vector<1x128xf32>
    %215 = arith.mulf %214, %141 : vector<1x128xf32>
    %216 = arith.addf %212, %215 : vector<1x128xf32>
    %c136 = arith.constant 136 : index
    %217 = memref.load %arg1[%c136] : memref<152xf32, #tpu.memory_space<smem>>
    %218 = vector.broadcast %217 : f32 to vector<1x128xf32>
    %219 = arith.addf %216, %218 : vector<1x128xf32>
    %c42 = arith.constant 42 : index
    %220 = memref.load %arg1[%c42] : memref<152xf32, #tpu.memory_space<smem>>
    %221 = vector.broadcast %220 : f32 to vector<1x128xf32>
    %222 = arith.mulf %221, %116 : vector<1x128xf32>
    %c43 = arith.constant 43 : index
    %223 = memref.load %arg1[%c43] : memref<152xf32, #tpu.memory_space<smem>>
    %224 = vector.broadcast %223 : f32 to vector<1x128xf32>
    %225 = arith.mulf %224, %121 : vector<1x128xf32>
    %226 = arith.addf %222, %225 : vector<1x128xf32>
    %c44 = arith.constant 44 : index
    %227 = memref.load %arg1[%c44] : memref<152xf32, #tpu.memory_space<smem>>
    %228 = vector.broadcast %227 : f32 to vector<1x128xf32>
    %229 = arith.mulf %228, %126 : vector<1x128xf32>
    %230 = arith.addf %226, %229 : vector<1x128xf32>
    %c45 = arith.constant 45 : index
    %231 = memref.load %arg1[%c45] : memref<152xf32, #tpu.memory_space<smem>>
    %232 = vector.broadcast %231 : f32 to vector<1x128xf32>
    %233 = arith.mulf %232, %131 : vector<1x128xf32>
    %234 = arith.addf %230, %233 : vector<1x128xf32>
    %c46 = arith.constant 46 : index
    %235 = memref.load %arg1[%c46] : memref<152xf32, #tpu.memory_space<smem>>
    %236 = vector.broadcast %235 : f32 to vector<1x128xf32>
    %237 = arith.mulf %236, %136 : vector<1x128xf32>
    %238 = arith.addf %234, %237 : vector<1x128xf32>
    %c47 = arith.constant 47 : index
    %239 = memref.load %arg1[%c47] : memref<152xf32, #tpu.memory_space<smem>>
    %240 = vector.broadcast %239 : f32 to vector<1x128xf32>
    %241 = arith.mulf %240, %141 : vector<1x128xf32>
    %242 = arith.addf %238, %241 : vector<1x128xf32>
    %c137 = arith.constant 137 : index
    %243 = memref.load %arg1[%c137] : memref<152xf32, #tpu.memory_space<smem>>
    %244 = vector.broadcast %243 : f32 to vector<1x128xf32>
    %245 = arith.addf %242, %244 : vector<1x128xf32>
    %c48 = arith.constant 48 : index
    %246 = memref.load %arg1[%c48] : memref<152xf32, #tpu.memory_space<smem>>
    %247 = vector.broadcast %246 : f32 to vector<1x128xf32>
    %248 = arith.mulf %247, %116 : vector<1x128xf32>
    %c49 = arith.constant 49 : index
    %249 = memref.load %arg1[%c49] : memref<152xf32, #tpu.memory_space<smem>>
    %250 = vector.broadcast %249 : f32 to vector<1x128xf32>
    %251 = arith.mulf %250, %121 : vector<1x128xf32>
    %252 = arith.addf %248, %251 : vector<1x128xf32>
    %c50 = arith.constant 50 : index
    %253 = memref.load %arg1[%c50] : memref<152xf32, #tpu.memory_space<smem>>
    %254 = vector.broadcast %253 : f32 to vector<1x128xf32>
    %255 = arith.mulf %254, %126 : vector<1x128xf32>
    %256 = arith.addf %252, %255 : vector<1x128xf32>
    %c51 = arith.constant 51 : index
    %257 = memref.load %arg1[%c51] : memref<152xf32, #tpu.memory_space<smem>>
    %258 = vector.broadcast %257 : f32 to vector<1x128xf32>
    %259 = arith.mulf %258, %131 : vector<1x128xf32>
    %260 = arith.addf %256, %259 : vector<1x128xf32>
    %c52 = arith.constant 52 : index
    %261 = memref.load %arg1[%c52] : memref<152xf32, #tpu.memory_space<smem>>
    %262 = vector.broadcast %261 : f32 to vector<1x128xf32>
    %263 = arith.mulf %262, %136 : vector<1x128xf32>
    %264 = arith.addf %260, %263 : vector<1x128xf32>
    %c53 = arith.constant 53 : index
    %265 = memref.load %arg1[%c53] : memref<152xf32, #tpu.memory_space<smem>>
    %266 = vector.broadcast %265 : f32 to vector<1x128xf32>
    %267 = arith.mulf %266, %141 : vector<1x128xf32>
    %268 = arith.addf %264, %267 : vector<1x128xf32>
    %c138 = arith.constant 138 : index
    %269 = memref.load %arg1[%c138] : memref<152xf32, #tpu.memory_space<smem>>
    %270 = vector.broadcast %269 : f32 to vector<1x128xf32>
    %271 = arith.addf %268, %270 : vector<1x128xf32>
    %c54 = arith.constant 54 : index
    %272 = memref.load %arg1[%c54] : memref<152xf32, #tpu.memory_space<smem>>
    %273 = vector.broadcast %272 : f32 to vector<1x128xf32>
    %274 = arith.mulf %273, %116 : vector<1x128xf32>
    %c55 = arith.constant 55 : index
    %275 = memref.load %arg1[%c55] : memref<152xf32, #tpu.memory_space<smem>>
    %276 = vector.broadcast %275 : f32 to vector<1x128xf32>
    %277 = arith.mulf %276, %121 : vector<1x128xf32>
    %278 = arith.addf %274, %277 : vector<1x128xf32>
    %c56 = arith.constant 56 : index
    %279 = memref.load %arg1[%c56] : memref<152xf32, #tpu.memory_space<smem>>
    %280 = vector.broadcast %279 : f32 to vector<1x128xf32>
    %281 = arith.mulf %280, %126 : vector<1x128xf32>
    %282 = arith.addf %278, %281 : vector<1x128xf32>
    %c57 = arith.constant 57 : index
    %283 = memref.load %arg1[%c57] : memref<152xf32, #tpu.memory_space<smem>>
    %284 = vector.broadcast %283 : f32 to vector<1x128xf32>
    %285 = arith.mulf %284, %131 : vector<1x128xf32>
    %286 = arith.addf %282, %285 : vector<1x128xf32>
    %c58 = arith.constant 58 : index
    %287 = memref.load %arg1[%c58] : memref<152xf32, #tpu.memory_space<smem>>
    %288 = vector.broadcast %287 : f32 to vector<1x128xf32>
    %289 = arith.mulf %288, %136 : vector<1x128xf32>
    %290 = arith.addf %286, %289 : vector<1x128xf32>
    %c59 = arith.constant 59 : index
    %291 = memref.load %arg1[%c59] : memref<152xf32, #tpu.memory_space<smem>>
    %292 = vector.broadcast %291 : f32 to vector<1x128xf32>
    %293 = arith.mulf %292, %141 : vector<1x128xf32>
    %294 = arith.addf %290, %293 : vector<1x128xf32>
    %c139 = arith.constant 139 : index
    %295 = memref.load %arg1[%c139] : memref<152xf32, #tpu.memory_space<smem>>
    %296 = vector.broadcast %295 : f32 to vector<1x128xf32>
    %297 = arith.addf %294, %296 : vector<1x128xf32>
    %c60 = arith.constant 60 : index
    %298 = memref.load %arg1[%c60] : memref<152xf32, #tpu.memory_space<smem>>
    %299 = vector.broadcast %298 : f32 to vector<1x128xf32>
    %300 = arith.mulf %299, %116 : vector<1x128xf32>
    %c61 = arith.constant 61 : index
    %301 = memref.load %arg1[%c61] : memref<152xf32, #tpu.memory_space<smem>>
    %302 = vector.broadcast %301 : f32 to vector<1x128xf32>
    %303 = arith.mulf %302, %121 : vector<1x128xf32>
    %304 = arith.addf %300, %303 : vector<1x128xf32>
    %c62 = arith.constant 62 : index
    %305 = memref.load %arg1[%c62] : memref<152xf32, #tpu.memory_space<smem>>
    %306 = vector.broadcast %305 : f32 to vector<1x128xf32>
    %307 = arith.mulf %306, %126 : vector<1x128xf32>
    %308 = arith.addf %304, %307 : vector<1x128xf32>
    %c63 = arith.constant 63 : index
    %309 = memref.load %arg1[%c63] : memref<152xf32, #tpu.memory_space<smem>>
    %310 = vector.broadcast %309 : f32 to vector<1x128xf32>
    %311 = arith.mulf %310, %131 : vector<1x128xf32>
    %312 = arith.addf %308, %311 : vector<1x128xf32>
    %c64 = arith.constant 64 : index
    %313 = memref.load %arg1[%c64] : memref<152xf32, #tpu.memory_space<smem>>
    %314 = vector.broadcast %313 : f32 to vector<1x128xf32>
    %315 = arith.mulf %314, %136 : vector<1x128xf32>
    %316 = arith.addf %312, %315 : vector<1x128xf32>
    %c65 = arith.constant 65 : index
    %317 = memref.load %arg1[%c65] : memref<152xf32, #tpu.memory_space<smem>>
    %318 = vector.broadcast %317 : f32 to vector<1x128xf32>
    %319 = arith.mulf %318, %141 : vector<1x128xf32>
    %320 = arith.addf %316, %319 : vector<1x128xf32>
    %c140 = arith.constant 140 : index
    %321 = memref.load %arg1[%c140] : memref<152xf32, #tpu.memory_space<smem>>
    %322 = vector.broadcast %321 : f32 to vector<1x128xf32>
    %323 = arith.addf %320, %322 : vector<1x128xf32>
    %c66 = arith.constant 66 : index
    %324 = memref.load %arg1[%c66] : memref<152xf32, #tpu.memory_space<smem>>
    %325 = vector.broadcast %324 : f32 to vector<1x128xf32>
    %326 = arith.mulf %325, %116 : vector<1x128xf32>
    %c67 = arith.constant 67 : index
    %327 = memref.load %arg1[%c67] : memref<152xf32, #tpu.memory_space<smem>>
    %328 = vector.broadcast %327 : f32 to vector<1x128xf32>
    %329 = arith.mulf %328, %121 : vector<1x128xf32>
    %330 = arith.addf %326, %329 : vector<1x128xf32>
    %c68 = arith.constant 68 : index
    %331 = memref.load %arg1[%c68] : memref<152xf32, #tpu.memory_space<smem>>
    %332 = vector.broadcast %331 : f32 to vector<1x128xf32>
    %333 = arith.mulf %332, %126 : vector<1x128xf32>
    %334 = arith.addf %330, %333 : vector<1x128xf32>
    %c69 = arith.constant 69 : index
    %335 = memref.load %arg1[%c69] : memref<152xf32, #tpu.memory_space<smem>>
    %336 = vector.broadcast %335 : f32 to vector<1x128xf32>
    %337 = arith.mulf %336, %131 : vector<1x128xf32>
    %338 = arith.addf %334, %337 : vector<1x128xf32>
    %c70 = arith.constant 70 : index
    %339 = memref.load %arg1[%c70] : memref<152xf32, #tpu.memory_space<smem>>
    %340 = vector.broadcast %339 : f32 to vector<1x128xf32>
    %341 = arith.mulf %340, %136 : vector<1x128xf32>
    %342 = arith.addf %338, %341 : vector<1x128xf32>
    %c71 = arith.constant 71 : index
    %343 = memref.load %arg1[%c71] : memref<152xf32, #tpu.memory_space<smem>>
    %344 = vector.broadcast %343 : f32 to vector<1x128xf32>
    %345 = arith.mulf %344, %141 : vector<1x128xf32>
    %346 = arith.addf %342, %345 : vector<1x128xf32>
    %c141 = arith.constant 141 : index
    %347 = memref.load %arg1[%c141] : memref<152xf32, #tpu.memory_space<smem>>
    %348 = vector.broadcast %347 : f32 to vector<1x128xf32>
    %349 = arith.addf %346, %348 : vector<1x128xf32>
    %350 = math.tanh %167 : vector<1x128xf32>
    %351 = math.tanh %193 : vector<1x128xf32>
    %352 = math.tanh %219 : vector<1x128xf32>
    %353 = math.tanh %245 : vector<1x128xf32>
    %354 = math.tanh %271 : vector<1x128xf32>
    %355 = math.tanh %297 : vector<1x128xf32>
    %356 = math.tanh %323 : vector<1x128xf32>
    %357 = math.tanh %349 : vector<1x128xf32>
    %c72 = arith.constant 72 : index
    %358 = memref.load %arg1[%c72] : memref<152xf32, #tpu.memory_space<smem>>
    %359 = vector.broadcast %358 : f32 to vector<1x128xf32>
    %360 = arith.mulf %359, %350 : vector<1x128xf32>
    %c73 = arith.constant 73 : index
    %361 = memref.load %arg1[%c73] : memref<152xf32, #tpu.memory_space<smem>>
    %362 = vector.broadcast %361 : f32 to vector<1x128xf32>
    %363 = arith.mulf %362, %351 : vector<1x128xf32>
    %364 = arith.addf %360, %363 : vector<1x128xf32>
    %c74 = arith.constant 74 : index
    %365 = memref.load %arg1[%c74] : memref<152xf32, #tpu.memory_space<smem>>
    %366 = vector.broadcast %365 : f32 to vector<1x128xf32>
    %367 = arith.mulf %366, %352 : vector<1x128xf32>
    %368 = arith.addf %364, %367 : vector<1x128xf32>
    %c75 = arith.constant 75 : index
    %369 = memref.load %arg1[%c75] : memref<152xf32, #tpu.memory_space<smem>>
    %370 = vector.broadcast %369 : f32 to vector<1x128xf32>
    %371 = arith.mulf %370, %353 : vector<1x128xf32>
    %372 = arith.addf %368, %371 : vector<1x128xf32>
    %c76 = arith.constant 76 : index
    %373 = memref.load %arg1[%c76] : memref<152xf32, #tpu.memory_space<smem>>
    %374 = vector.broadcast %373 : f32 to vector<1x128xf32>
    %375 = arith.mulf %374, %354 : vector<1x128xf32>
    %376 = arith.addf %372, %375 : vector<1x128xf32>
    %c77 = arith.constant 77 : index
    %377 = memref.load %arg1[%c77] : memref<152xf32, #tpu.memory_space<smem>>
    %378 = vector.broadcast %377 : f32 to vector<1x128xf32>
    %379 = arith.mulf %378, %355 : vector<1x128xf32>
    %380 = arith.addf %376, %379 : vector<1x128xf32>
    %c78 = arith.constant 78 : index
    %381 = memref.load %arg1[%c78] : memref<152xf32, #tpu.memory_space<smem>>
    %382 = vector.broadcast %381 : f32 to vector<1x128xf32>
    %383 = arith.mulf %382, %356 : vector<1x128xf32>
    %384 = arith.addf %380, %383 : vector<1x128xf32>
    %c79 = arith.constant 79 : index
    %385 = memref.load %arg1[%c79] : memref<152xf32, #tpu.memory_space<smem>>
    %386 = vector.broadcast %385 : f32 to vector<1x128xf32>
    %387 = arith.mulf %386, %357 : vector<1x128xf32>
    %388 = arith.addf %384, %387 : vector<1x128xf32>
    %c142 = arith.constant 142 : index
    %389 = memref.load %arg1[%c142] : memref<152xf32, #tpu.memory_space<smem>>
    %390 = vector.broadcast %389 : f32 to vector<1x128xf32>
    %391 = arith.addf %388, %390 : vector<1x128xf32>
    %c80 = arith.constant 80 : index
    %392 = memref.load %arg1[%c80] : memref<152xf32, #tpu.memory_space<smem>>
    %393 = vector.broadcast %392 : f32 to vector<1x128xf32>
    %394 = arith.mulf %393, %350 : vector<1x128xf32>
    %c81 = arith.constant 81 : index
    %395 = memref.load %arg1[%c81] : memref<152xf32, #tpu.memory_space<smem>>
    %396 = vector.broadcast %395 : f32 to vector<1x128xf32>
    %397 = arith.mulf %396, %351 : vector<1x128xf32>
    %398 = arith.addf %394, %397 : vector<1x128xf32>
    %c82 = arith.constant 82 : index
    %399 = memref.load %arg1[%c82] : memref<152xf32, #tpu.memory_space<smem>>
    %400 = vector.broadcast %399 : f32 to vector<1x128xf32>
    %401 = arith.mulf %400, %352 : vector<1x128xf32>
    %402 = arith.addf %398, %401 : vector<1x128xf32>
    %c83 = arith.constant 83 : index
    %403 = memref.load %arg1[%c83] : memref<152xf32, #tpu.memory_space<smem>>
    %404 = vector.broadcast %403 : f32 to vector<1x128xf32>
    %405 = arith.mulf %404, %353 : vector<1x128xf32>
    %406 = arith.addf %402, %405 : vector<1x128xf32>
    %c84 = arith.constant 84 : index
    %407 = memref.load %arg1[%c84] : memref<152xf32, #tpu.memory_space<smem>>
    %408 = vector.broadcast %407 : f32 to vector<1x128xf32>
    %409 = arith.mulf %408, %354 : vector<1x128xf32>
    %410 = arith.addf %406, %409 : vector<1x128xf32>
    %c85 = arith.constant 85 : index
    %411 = memref.load %arg1[%c85] : memref<152xf32, #tpu.memory_space<smem>>
    %412 = vector.broadcast %411 : f32 to vector<1x128xf32>
    %413 = arith.mulf %412, %355 : vector<1x128xf32>
    %414 = arith.addf %410, %413 : vector<1x128xf32>
    %c86 = arith.constant 86 : index
    %415 = memref.load %arg1[%c86] : memref<152xf32, #tpu.memory_space<smem>>
    %416 = vector.broadcast %415 : f32 to vector<1x128xf32>
    %417 = arith.mulf %416, %356 : vector<1x128xf32>
    %418 = arith.addf %414, %417 : vector<1x128xf32>
    %c87 = arith.constant 87 : index
    %419 = memref.load %arg1[%c87] : memref<152xf32, #tpu.memory_space<smem>>
    %420 = vector.broadcast %419 : f32 to vector<1x128xf32>
    %421 = arith.mulf %420, %357 : vector<1x128xf32>
    %422 = arith.addf %418, %421 : vector<1x128xf32>
    %c143 = arith.constant 143 : index
    %423 = memref.load %arg1[%c143] : memref<152xf32, #tpu.memory_space<smem>>
    %424 = vector.broadcast %423 : f32 to vector<1x128xf32>
    %425 = arith.addf %422, %424 : vector<1x128xf32>
    %c88 = arith.constant 88 : index
    %426 = memref.load %arg1[%c88] : memref<152xf32, #tpu.memory_space<smem>>
    %427 = vector.broadcast %426 : f32 to vector<1x128xf32>
    %428 = arith.mulf %427, %350 : vector<1x128xf32>
    %c89 = arith.constant 89 : index
    %429 = memref.load %arg1[%c89] : memref<152xf32, #tpu.memory_space<smem>>
    %430 = vector.broadcast %429 : f32 to vector<1x128xf32>
    %431 = arith.mulf %430, %351 : vector<1x128xf32>
    %432 = arith.addf %428, %431 : vector<1x128xf32>
    %c90 = arith.constant 90 : index
    %433 = memref.load %arg1[%c90] : memref<152xf32, #tpu.memory_space<smem>>
    %434 = vector.broadcast %433 : f32 to vector<1x128xf32>
    %435 = arith.mulf %434, %352 : vector<1x128xf32>
    %436 = arith.addf %432, %435 : vector<1x128xf32>
    %c91 = arith.constant 91 : index
    %437 = memref.load %arg1[%c91] : memref<152xf32, #tpu.memory_space<smem>>
    %438 = vector.broadcast %437 : f32 to vector<1x128xf32>
    %439 = arith.mulf %438, %353 : vector<1x128xf32>
    %440 = arith.addf %436, %439 : vector<1x128xf32>
    %c92 = arith.constant 92 : index
    %441 = memref.load %arg1[%c92] : memref<152xf32, #tpu.memory_space<smem>>
    %442 = vector.broadcast %441 : f32 to vector<1x128xf32>
    %443 = arith.mulf %442, %354 : vector<1x128xf32>
    %444 = arith.addf %440, %443 : vector<1x128xf32>
    %c93 = arith.constant 93 : index
    %445 = memref.load %arg1[%c93] : memref<152xf32, #tpu.memory_space<smem>>
    %446 = vector.broadcast %445 : f32 to vector<1x128xf32>
    %447 = arith.mulf %446, %355 : vector<1x128xf32>
    %448 = arith.addf %444, %447 : vector<1x128xf32>
    %c94 = arith.constant 94 : index
    %449 = memref.load %arg1[%c94] : memref<152xf32, #tpu.memory_space<smem>>
    %450 = vector.broadcast %449 : f32 to vector<1x128xf32>
    %451 = arith.mulf %450, %356 : vector<1x128xf32>
    %452 = arith.addf %448, %451 : vector<1x128xf32>
    %c95 = arith.constant 95 : index
    %453 = memref.load %arg1[%c95] : memref<152xf32, #tpu.memory_space<smem>>
    %454 = vector.broadcast %453 : f32 to vector<1x128xf32>
    %455 = arith.mulf %454, %357 : vector<1x128xf32>
    %456 = arith.addf %452, %455 : vector<1x128xf32>
    %c144 = arith.constant 144 : index
    %457 = memref.load %arg1[%c144] : memref<152xf32, #tpu.memory_space<smem>>
    %458 = vector.broadcast %457 : f32 to vector<1x128xf32>
    %459 = arith.addf %456, %458 : vector<1x128xf32>
    %c96 = arith.constant 96 : index
    %460 = memref.load %arg1[%c96] : memref<152xf32, #tpu.memory_space<smem>>
    %461 = vector.broadcast %460 : f32 to vector<1x128xf32>
    %462 = arith.mulf %461, %350 : vector<1x128xf32>
    %c97 = arith.constant 97 : index
    %463 = memref.load %arg1[%c97] : memref<152xf32, #tpu.memory_space<smem>>
    %464 = vector.broadcast %463 : f32 to vector<1x128xf32>
    %465 = arith.mulf %464, %351 : vector<1x128xf32>
    %466 = arith.addf %462, %465 : vector<1x128xf32>
    %c98 = arith.constant 98 : index
    %467 = memref.load %arg1[%c98] : memref<152xf32, #tpu.memory_space<smem>>
    %468 = vector.broadcast %467 : f32 to vector<1x128xf32>
    %469 = arith.mulf %468, %352 : vector<1x128xf32>
    %470 = arith.addf %466, %469 : vector<1x128xf32>
    %c99 = arith.constant 99 : index
    %471 = memref.load %arg1[%c99] : memref<152xf32, #tpu.memory_space<smem>>
    %472 = vector.broadcast %471 : f32 to vector<1x128xf32>
    %473 = arith.mulf %472, %353 : vector<1x128xf32>
    %474 = arith.addf %470, %473 : vector<1x128xf32>
    %c100 = arith.constant 100 : index
    %475 = memref.load %arg1[%c100] : memref<152xf32, #tpu.memory_space<smem>>
    %476 = vector.broadcast %475 : f32 to vector<1x128xf32>
    %477 = arith.mulf %476, %354 : vector<1x128xf32>
    %478 = arith.addf %474, %477 : vector<1x128xf32>
    %c101 = arith.constant 101 : index
    %479 = memref.load %arg1[%c101] : memref<152xf32, #tpu.memory_space<smem>>
    %480 = vector.broadcast %479 : f32 to vector<1x128xf32>
    %481 = arith.mulf %480, %355 : vector<1x128xf32>
    %482 = arith.addf %478, %481 : vector<1x128xf32>
    %c102 = arith.constant 102 : index
    %483 = memref.load %arg1[%c102] : memref<152xf32, #tpu.memory_space<smem>>
    %484 = vector.broadcast %483 : f32 to vector<1x128xf32>
    %485 = arith.mulf %484, %356 : vector<1x128xf32>
    %486 = arith.addf %482, %485 : vector<1x128xf32>
    %c103 = arith.constant 103 : index
    %487 = memref.load %arg1[%c103] : memref<152xf32, #tpu.memory_space<smem>>
    %488 = vector.broadcast %487 : f32 to vector<1x128xf32>
    %489 = arith.mulf %488, %357 : vector<1x128xf32>
    %490 = arith.addf %486, %489 : vector<1x128xf32>
    %c145 = arith.constant 145 : index
    %491 = memref.load %arg1[%c145] : memref<152xf32, #tpu.memory_space<smem>>
    %492 = vector.broadcast %491 : f32 to vector<1x128xf32>
    %493 = arith.addf %490, %492 : vector<1x128xf32>
    %494 = arith.negf %391 : vector<1x128xf32>
    %495 = math.exp %494 : vector<1x128xf32>
    %cst_19 = arith.constant 1.000000e+00 : f32
    %496 = vector.broadcast %cst_19 : f32 to vector<1x128xf32>
    %497 = arith.addf %496, %495 : vector<1x128xf32>
    %498 = arith.divf %496, %497 : vector<1x128xf32>
    %499 = arith.negf %425 : vector<1x128xf32>
    %500 = math.exp %499 : vector<1x128xf32>
    %cst_20 = arith.constant 1.000000e+00 : f32
    %501 = vector.broadcast %cst_20 : f32 to vector<1x128xf32>
    %502 = arith.addf %501, %500 : vector<1x128xf32>
    %503 = arith.divf %501, %502 : vector<1x128xf32>
    %504 = arith.negf %459 : vector<1x128xf32>
    %505 = math.exp %504 : vector<1x128xf32>
    %cst_21 = arith.constant 1.000000e+00 : f32
    %506 = vector.broadcast %cst_21 : f32 to vector<1x128xf32>
    %507 = arith.addf %506, %505 : vector<1x128xf32>
    %508 = arith.divf %506, %507 : vector<1x128xf32>
    %509 = arith.negf %493 : vector<1x128xf32>
    %510 = math.exp %509 : vector<1x128xf32>
    %cst_22 = arith.constant 1.000000e+00 : f32
    %511 = vector.broadcast %cst_22 : f32 to vector<1x128xf32>
    %512 = arith.addf %511, %510 : vector<1x128xf32>
    %513 = arith.divf %511, %512 : vector<1x128xf32>
    %c104 = arith.constant 104 : index
    %514 = memref.load %arg1[%c104] : memref<152xf32, #tpu.memory_space<smem>>
    %515 = vector.broadcast %514 : f32 to vector<1x128xf32>
    %516 = arith.mulf %515, %498 : vector<1x128xf32>
    %c105 = arith.constant 105 : index
    %517 = memref.load %arg1[%c105] : memref<152xf32, #tpu.memory_space<smem>>
    %518 = vector.broadcast %517 : f32 to vector<1x128xf32>
    %519 = arith.mulf %518, %503 : vector<1x128xf32>
    %520 = arith.addf %516, %519 : vector<1x128xf32>
    %c106 = arith.constant 106 : index
    %521 = memref.load %arg1[%c106] : memref<152xf32, #tpu.memory_space<smem>>
    %522 = vector.broadcast %521 : f32 to vector<1x128xf32>
    %523 = arith.mulf %522, %508 : vector<1x128xf32>
    %524 = arith.addf %520, %523 : vector<1x128xf32>
    %c107 = arith.constant 107 : index
    %525 = memref.load %arg1[%c107] : memref<152xf32, #tpu.memory_space<smem>>
    %526 = vector.broadcast %525 : f32 to vector<1x128xf32>
    %527 = arith.mulf %526, %513 : vector<1x128xf32>
    %528 = arith.addf %524, %527 : vector<1x128xf32>
    %c146 = arith.constant 146 : index
    %529 = memref.load %arg1[%c146] : memref<152xf32, #tpu.memory_space<smem>>
    %530 = vector.broadcast %529 : f32 to vector<1x128xf32>
    %531 = arith.addf %528, %530 : vector<1x128xf32>
    %c108 = arith.constant 108 : index
    %532 = memref.load %arg1[%c108] : memref<152xf32, #tpu.memory_space<smem>>
    %533 = vector.broadcast %532 : f32 to vector<1x128xf32>
    %534 = arith.mulf %533, %498 : vector<1x128xf32>
    %c109 = arith.constant 109 : index
    %535 = memref.load %arg1[%c109] : memref<152xf32, #tpu.memory_space<smem>>
    %536 = vector.broadcast %535 : f32 to vector<1x128xf32>
    %537 = arith.mulf %536, %503 : vector<1x128xf32>
    %538 = arith.addf %534, %537 : vector<1x128xf32>
    %c110 = arith.constant 110 : index
    %539 = memref.load %arg1[%c110] : memref<152xf32, #tpu.memory_space<smem>>
    %540 = vector.broadcast %539 : f32 to vector<1x128xf32>
    %541 = arith.mulf %540, %508 : vector<1x128xf32>
    %542 = arith.addf %538, %541 : vector<1x128xf32>
    %c111 = arith.constant 111 : index
    %543 = memref.load %arg1[%c111] : memref<152xf32, #tpu.memory_space<smem>>
    %544 = vector.broadcast %543 : f32 to vector<1x128xf32>
    %545 = arith.mulf %544, %513 : vector<1x128xf32>
    %546 = arith.addf %542, %545 : vector<1x128xf32>
    %c147 = arith.constant 147 : index
    %547 = memref.load %arg1[%c147] : memref<152xf32, #tpu.memory_space<smem>>
    %548 = vector.broadcast %547 : f32 to vector<1x128xf32>
    %549 = arith.addf %546, %548 : vector<1x128xf32>
    %c112 = arith.constant 112 : index
    %550 = memref.load %arg1[%c112] : memref<152xf32, #tpu.memory_space<smem>>
    %551 = vector.broadcast %550 : f32 to vector<1x128xf32>
    %552 = arith.mulf %551, %498 : vector<1x128xf32>
    %c113 = arith.constant 113 : index
    %553 = memref.load %arg1[%c113] : memref<152xf32, #tpu.memory_space<smem>>
    %554 = vector.broadcast %553 : f32 to vector<1x128xf32>
    %555 = arith.mulf %554, %503 : vector<1x128xf32>
    %556 = arith.addf %552, %555 : vector<1x128xf32>
    %c114 = arith.constant 114 : index
    %557 = memref.load %arg1[%c114] : memref<152xf32, #tpu.memory_space<smem>>
    %558 = vector.broadcast %557 : f32 to vector<1x128xf32>
    %559 = arith.mulf %558, %508 : vector<1x128xf32>
    %560 = arith.addf %556, %559 : vector<1x128xf32>
    %c115 = arith.constant 115 : index
    %561 = memref.load %arg1[%c115] : memref<152xf32, #tpu.memory_space<smem>>
    %562 = vector.broadcast %561 : f32 to vector<1x128xf32>
    %563 = arith.mulf %562, %513 : vector<1x128xf32>
    %564 = arith.addf %560, %563 : vector<1x128xf32>
    %c148 = arith.constant 148 : index
    %565 = memref.load %arg1[%c148] : memref<152xf32, #tpu.memory_space<smem>>
    %566 = vector.broadcast %565 : f32 to vector<1x128xf32>
    %567 = arith.addf %564, %566 : vector<1x128xf32>
    %c116 = arith.constant 116 : index
    %568 = memref.load %arg1[%c116] : memref<152xf32, #tpu.memory_space<smem>>
    %569 = vector.broadcast %568 : f32 to vector<1x128xf32>
    %570 = arith.mulf %569, %498 : vector<1x128xf32>
    %c117 = arith.constant 117 : index
    %571 = memref.load %arg1[%c117] : memref<152xf32, #tpu.memory_space<smem>>
    %572 = vector.broadcast %571 : f32 to vector<1x128xf32>
    %573 = arith.mulf %572, %503 : vector<1x128xf32>
    %574 = arith.addf %570, %573 : vector<1x128xf32>
    %c118 = arith.constant 118 : index
    %575 = memref.load %arg1[%c118] : memref<152xf32, #tpu.memory_space<smem>>
    %576 = vector.broadcast %575 : f32 to vector<1x128xf32>
    %577 = arith.mulf %576, %508 : vector<1x128xf32>
    %578 = arith.addf %574, %577 : vector<1x128xf32>
    %c119 = arith.constant 119 : index
    %579 = memref.load %arg1[%c119] : memref<152xf32, #tpu.memory_space<smem>>
    %580 = vector.broadcast %579 : f32 to vector<1x128xf32>
    %581 = arith.mulf %580, %513 : vector<1x128xf32>
    %582 = arith.addf %578, %581 : vector<1x128xf32>
    %c149 = arith.constant 149 : index
    %583 = memref.load %arg1[%c149] : memref<152xf32, #tpu.memory_space<smem>>
    %584 = vector.broadcast %583 : f32 to vector<1x128xf32>
    %585 = arith.addf %582, %584 : vector<1x128xf32>
    %cst_23 = arith.constant 0.000000e+00 : f32
    %586 = vector.broadcast %cst_23 : f32 to vector<1x128xf32>
    %587 = arith.cmpf ogt, %531, %586 : vector<1x128xf32>
    %588 = math.exp %531 : vector<1x128xf32>
    %cst_24 = arith.constant 1.000000e+00 : f32
    %589 = vector.broadcast %cst_24 : f32 to vector<1x128xf32>
    %590 = arith.subf %588, %589 : vector<1x128xf32>
    %591 = arith.select %587, %531, %590 : vector<1x128xi1>, vector<1x128xf32>
    %cst_25 = arith.constant 0.000000e+00 : f32
    %592 = vector.broadcast %cst_25 : f32 to vector<1x128xf32>
    %593 = arith.cmpf ogt, %549, %592 : vector<1x128xf32>
    %594 = math.exp %549 : vector<1x128xf32>
    %cst_26 = arith.constant 1.000000e+00 : f32
    %595 = vector.broadcast %cst_26 : f32 to vector<1x128xf32>
    %596 = arith.subf %594, %595 : vector<1x128xf32>
    %597 = arith.select %593, %549, %596 : vector<1x128xi1>, vector<1x128xf32>
    %cst_27 = arith.constant 0.000000e+00 : f32
    %598 = vector.broadcast %cst_27 : f32 to vector<1x128xf32>
    %599 = arith.cmpf ogt, %567, %598 : vector<1x128xf32>
    %600 = math.exp %567 : vector<1x128xf32>
    %cst_28 = arith.constant 1.000000e+00 : f32
    %601 = vector.broadcast %cst_28 : f32 to vector<1x128xf32>
    %602 = arith.subf %600, %601 : vector<1x128xf32>
    %603 = arith.select %599, %567, %602 : vector<1x128xi1>, vector<1x128xf32>
    %cst_29 = arith.constant 0.000000e+00 : f32
    %604 = vector.broadcast %cst_29 : f32 to vector<1x128xf32>
    %605 = arith.cmpf ogt, %585, %604 : vector<1x128xf32>
    %606 = math.exp %585 : vector<1x128xf32>
    %cst_30 = arith.constant 1.000000e+00 : f32
    %607 = vector.broadcast %cst_30 : f32 to vector<1x128xf32>
    %608 = arith.subf %606, %607 : vector<1x128xf32>
    %609 = arith.select %605, %585, %608 : vector<1x128xi1>, vector<1x128xf32>
    %c120 = arith.constant 120 : index
    %610 = memref.load %arg1[%c120] : memref<152xf32, #tpu.memory_space<smem>>
    %611 = vector.broadcast %610 : f32 to vector<1x128xf32>
    %612 = arith.mulf %611, %591 : vector<1x128xf32>
    %c121 = arith.constant 121 : index
    %613 = memref.load %arg1[%c121] : memref<152xf32, #tpu.memory_space<smem>>
    %614 = vector.broadcast %613 : f32 to vector<1x128xf32>
    %615 = arith.mulf %614, %597 : vector<1x128xf32>
    %616 = arith.addf %612, %615 : vector<1x128xf32>
    %c122 = arith.constant 122 : index
    %617 = memref.load %arg1[%c122] : memref<152xf32, #tpu.memory_space<smem>>
    %618 = vector.broadcast %617 : f32 to vector<1x128xf32>
    %619 = arith.mulf %618, %603 : vector<1x128xf32>
    %620 = arith.addf %616, %619 : vector<1x128xf32>
    %c123 = arith.constant 123 : index
    %621 = memref.load %arg1[%c123] : memref<152xf32, #tpu.memory_space<smem>>
    %622 = vector.broadcast %621 : f32 to vector<1x128xf32>
    %623 = arith.mulf %622, %609 : vector<1x128xf32>
    %624 = arith.addf %620, %623 : vector<1x128xf32>
    %c150 = arith.constant 150 : index
    %625 = memref.load %arg1[%c150] : memref<152xf32, #tpu.memory_space<smem>>
    %626 = vector.broadcast %625 : f32 to vector<1x128xf32>
    %627 = arith.addf %624, %626 : vector<1x128xf32>
    %c124 = arith.constant 124 : index
    %628 = memref.load %arg1[%c124] : memref<152xf32, #tpu.memory_space<smem>>
    %629 = vector.broadcast %628 : f32 to vector<1x128xf32>
    %630 = arith.mulf %629, %591 : vector<1x128xf32>
    %c125 = arith.constant 125 : index
    %631 = memref.load %arg1[%c125] : memref<152xf32, #tpu.memory_space<smem>>
    %632 = vector.broadcast %631 : f32 to vector<1x128xf32>
    %633 = arith.mulf %632, %597 : vector<1x128xf32>
    %634 = arith.addf %630, %633 : vector<1x128xf32>
    %c126 = arith.constant 126 : index
    %635 = memref.load %arg1[%c126] : memref<152xf32, #tpu.memory_space<smem>>
    %636 = vector.broadcast %635 : f32 to vector<1x128xf32>
    %637 = arith.mulf %636, %603 : vector<1x128xf32>
    %638 = arith.addf %634, %637 : vector<1x128xf32>
    %c127 = arith.constant 127 : index
    %639 = memref.load %arg1[%c127] : memref<152xf32, #tpu.memory_space<smem>>
    %640 = vector.broadcast %639 : f32 to vector<1x128xf32>
    %641 = arith.mulf %640, %609 : vector<1x128xf32>
    %642 = arith.addf %638, %641 : vector<1x128xf32>
    %c151 = arith.constant 151 : index
    %643 = memref.load %arg1[%c151] : memref<152xf32, #tpu.memory_space<smem>>
    %644 = vector.broadcast %643 : f32 to vector<1x128xf32>
    %645 = arith.addf %642, %644 : vector<1x128xf32>
    %646 = arith.maximumf %627, %645 : vector<1x128xf32>
    %647 = arith.subf %627, %646 : vector<1x128xf32>
    %648 = math.exp %647 : vector<1x128xf32>
    %649 = arith.subf %645, %646 : vector<1x128xf32>
    %650 = math.exp %649 : vector<1x128xf32>
    %651 = arith.addf %648, %650 : vector<1x128xf32>
    %cst_31 = arith.constant 1.000000e+00 : f32
    %652 = vector.broadcast %cst_31 : f32 to vector<1x128xf32>
    %653 = arith.divf %652, %651 : vector<1x128xf32>
    %654 = arith.mulf %648, %653 : vector<1x128xf32>
    %c0_32 = arith.constant 0 : index
    %c0_33 = arith.constant 0 : index
    %655 = vector.load %arg3[%c0_32, %c0_33] : memref<2x128xf32, #tpu.memory_space<vmem>>, vector<1x128xf32>
    tpu.vector_store %arg3[%c0_32, %c0_33], %654 {strides = array<i32>} : memref<2x128xf32, #tpu.memory_space<vmem>>, vector<1x128xf32>,
    %656 = arith.mulf %650, %653 : vector<1x128xf32>
    %c1_34 = arith.constant 1 : index
    %c0_35 = arith.constant 0 : index
    %657 = vector.load %arg3[%c1_34, %c0_35] : memref<2x128xf32, #tpu.memory_space<vmem>>, vector<1x128xf32>
    tpu.vector_store %arg3[%c1_34, %c0_35], %656 {strides = array<i32>} : memref<2x128xf32, #tpu.memory_space<vmem>>, vector<1x128xf32>,
    return
  }
  func.func @transform_0(%arg0: i32) -> i32 {
    %c0_i32 = arith.constant 0 : i32
    %c0_i32_0 = arith.constant 0 : i32
    return %c0_i32 : i32
  }
  func.func @transform_1(%arg0: i32) -> (i32, i32) {
    %c0_i32 = arith.constant 0 : i32
    %c0_i32_0 = arith.constant 0 : i32
    return %c0_i32, %arg0 : i32, i32
  }
  func.func @transform_2(%arg0: i32) -> (i32, i32) {
    %c0_i32 = arith.constant 0 : i32
    %c0_i32_0 = arith.constant 0 : i32
    return %c0_i32, %arg0 : i32, i32
  }
}

</mosaic_0001>

<llo_original>
// kernel: simple_nn_forward.1
$region0: #{simple_nn_forward.1}
  #allocation0 [shape = 'u32[]', space=smem, size = 0x4, offset = 0x4, fixed_abs, tag = 'smem constant byte address 0x4 - core index']
  #allocation1 [shape = 'u32[144,128]{1,0:T(1,128)}', space=vmem, size = 0x12000, scoped, tag = 'internal scratch']
  %s0 = inlined_call_operand.vmem [shape: f32[152], index: 0, kind: input, shape index: {}]
  %s1 = inlined_call_operand.vmem [shape: f32[4,128], index: 1, kind: input, shape index: {}]
  %s2 = inlined_call_operand.vmem [shape: f32[2,128], index: 2, kind: output, shape index: {}]
  %s3 = sld [smem:[#allocation0]]
  $region22: #{simple_nn_forward.1} parent=0
    _
  %s5 = ssub.s32 1, %s3
  %s6 = scalar_select 0, %s5, %s3
  $region1: #{simple_nn_forward.1} parent=0
    #allocation2 [shape = 'u8[1024]{0}', space=smem, size = 0x400, scoped, tag = 'input window, operand 0, single buffered']
    #allocation3 [shape = 's32[1]{0}', space=sflag, size = 0x4, scoped, tag = 'scoped memory for simple_nn_forward.1']
    %7 = vsyncpa [#allocation3], 0
    // Predicated region
    $region2: #{simple_nn_forward.1} parent=1 // pred_check
      _
    $region3: #{simple_nn_forward.1} parent=1 // pred_check_branch
      %9 = sbr.rel (0) target = $region5
    $region4: #{simple_nn_forward.1} parent=1 // pred_region
      %s11 = ssub.s32 32, 32
      %12 = vsyncadd [#allocation3], %s11
      %s14 = sshll.u32 %s0, 4
      %s15 = int_to_ptr.vmem [resolvable:$true] %s14
      %17 = dma.vmem_to_smem %s15, 32, [#allocation2], [#allocation3]
    $region5: #{simple_nn_forward.1} parent=1 // pred_fallthru
      _
    // Predicated region
    $region6: #{simple_nn_forward.1} parent=1 // pred_check
      _
    $region7: #{simple_nn_forward.1} parent=1 // pred_check_branch
      %19 = sbr.rel (0) target = $region9
    $region8: #{simple_nn_forward.1} parent=1 // pred_region
      _
    $region9: #{simple_nn_forward.1} parent=1 // pred_fallthru
      _
    // Predicated region
    $region10: #{simple_nn_forward.1} parent=1 // pred_check
      _
    $region11: #{simple_nn_forward.1} parent=1 // pred_check_branch
      %21 = sbr.rel (0) target = $region13
    $region12: #{simple_nn_forward.1} parent=1 // pred_region
      %22 = dma.done [#allocation3], 32
    $region13: #{simple_nn_forward.1} parent=1 // pred_fallthru
      _
    %23 = sfence
    %v24 = vld [vmem:[%s1] sm:$0x1]
    %v25 = vld [vmem:[%s1 + $0x1] sm:$0x1]
    %v26 = vld [vmem:[%s1 + $0x2] sm:$0x1]
    %v27 = vld [vmem:[%s1 + $0x3] sm:$0x1]
    %s28 = sld [smem:[#allocation2]]
    %v29 = vstv %s28
    %v30 = vmul.f32 %v29, %v24
    %s31 = sld [smem:[#allocation2 + $0x1]]
    %v32 = vstv %s31
    %v33 = vmul.f32 %v32, %v25
    %v34 = vadd.f32 %v30, %v33
    %s35 = sld [smem:[#allocation2 + $0x2]]
    %v36 = vstv %s35
    %v37 = vmul.f32 %v36, %v26
    %v38 = vadd.f32 %v34, %v37
    %s39 = sld [smem:[#allocation2 + $0x3]]
    %v40 = vstv %s39
    %v41 = vmul.f32 %v40, %v27
    %v42 = vadd.f32 %v38, %v41
    %s43 = sld [smem:[#allocation2 + $0x80]]
    %v44 = vstv %s43
    %v45 = vadd.f32 %v42, %v44
    %s46 = sld [smem:[#allocation2 + $0x4]]
    %v47 = vstv %s46
    %v48 = vmul.f32 %v47, %v24
    %s49 = sld [smem:[#allocation2 + $0x5]]
    %v50 = vstv %s49
    %v51 = vmul.f32 %v50, %v25
    %v52 = vadd.f32 %v48, %v51
    %s53 = sld [smem:[#allocation2 + $0x6]]
    %v54 = vstv %s53
    %v55 = vmul.f32 %v54, %v26
    %v56 = vadd.f32 %v52, %v55
    %s57 = sld [smem:[#allocation2 + $0x7]]
    %v58 = vstv %s57
    %v59 = vmul.f32 %v58, %v27
    %v60 = vadd.f32 %v56, %v59
    %s61 = sld [smem:[#allocation2 + $0x81]]
    %v62 = vstv %s61
    %v63 = vadd.f32 %v60, %v62
    %s64 = sld [smem:[#allocation2 + $0x8]]
    %v65 = vstv %s64
    %v66 = vmul.f32 %v65, %v24
    %s67 = sld [smem:[#allocation2 + $0x9]]
    %v68 = vstv %s67
    %v69 = vmul.f32 %v68, %v25
    %v70 = vadd.f32 %v66, %v69
    %s71 = sld [smem:[#allocation2 + $0xa]]
    %v72 = vstv %s71
    %v73 = vmul.f32 %v72, %v26
    %v74 = vadd.f32 %v70, %v73
    %s75 = sld [smem:[#allocation2 + $0xb]]
    %v76 = vstv %s75
    %v77 = vmul.f32 %v76, %v27
    %v78 = vadd.f32 %v74, %v77
    %s79 = sld [smem:[#allocation2 + $0x82]]
    %v80 = vstv %s79
    %v81 = vadd.f32 %v78, %v80
    %s82 = sld [smem:[#allocation2 + $0xc]]
    %v83 = vstv %s82
    %v84 = vmul.f32 %v83, %v24
    %s85 = sld [smem:[#allocation2 + $0xd]]
    %v86 = vstv %s85
    %v87 = vmul.f32 %v86, %v25
    %v88 = vadd.f32 %v84, %v87
    %s89 = sld [smem:[#allocation2 + $0xe]]
    %v90 = vstv %s89
    %v91 = vmul.f32 %v90, %v26
    %v92 = vadd.f32 %v88, %v91
    %s93 = sld [smem:[#allocation2 + $0xf]]
    %v94 = vstv %s93
    %v95 = vmul.f32 %v94, %v27
    %v96 = vadd.f32 %v92, %v95
    %s97 = sld [smem:[#allocation2 + $0x83]]
    %v98 = vstv %s97
    %v99 = vadd.f32 %v96, %v98
    %s100 = sld [smem:[#allocation2 + $0x10]]
    %v101 = vstv %s100
    %v102 = vmul.f32 %v101, %v24
    %s103 = sld [smem:[#allocation2 + $0x11]]
    %v104 = vstv %s103
    %v105 = vmul.f32 %v104, %v25
    %v106 = vadd.f32 %v102, %v105
    %s107 = sld [smem:[#allocation2 + $0x12]]
    %v108 = vstv %s107
    %v109 = vmul.f32 %v108, %v26
    %v110 = vadd.f32 %v106, %v109
    %s111 = sld [smem:[#allocation2 + $0x13]]
    %v112 = vstv %s111
    %v113 = vmul.f32 %v112, %v27
    %v114 = vadd.f32 %v110, %v113
    %s115 = sld [smem:[#allocation2 + $0x84]]
    %v116 = vstv %s115
    %v117 = vadd.f32 %v114, %v116
    %s118 = sld [smem:[#allocation2 + $0x14]]
    %v119 = vstv %s118
    %v120 = vmul.f32 %v119, %v24
    %s121 = sld [smem:[#allocation2 + $0x15]]
    %v122 = vstv %s121
    %v123 = vmul.f32 %v122, %v25
    %v124 = vadd.f32 %v120, %v123
    %s125 = sld [smem:[#allocation2 + $0x16]]
    %v126 = vstv %s125
    %v127 = vmul.f32 %v126, %v26
    %v128 = vadd.f32 %v124, %v127
    %s129 = sld [smem:[#allocation2 + $0x17]]
    %v130 = vstv %s129
    %v131 = vmul.f32 %v130, %v27
    %v132 = vadd.f32 %v128, %v131
    %s133 = sld [smem:[#allocation2 + $0x85]]
    %v134 = vstv %s133
    %v135 = vadd.f32 %v132, %v134
    %vm136 = vcmp.ge.f32.partialorder %v45, 0.0
    %v137 = vmul.f32 %v45, 0.01
    %v138 = vsel %vm136, %v45, %v137
    %vm139 = vcmp.ge.f32.partialorder %v63, 0.0
    %v140 = vmul.f32 %v63, 0.01
    %v141 = vsel %vm139, %v63, %v140
    %vm142 = vcmp.ge.f32.partialorder %v81, 0.0
    %v143 = vmul.f32 %v81, 0.01
    %v144 = vsel %vm142, %v81, %v143
    %vm145 = vcmp.ge.f32.partialorder %v99, 0.0
    %v146 = vmul.f32 %v99, 0.01
    %v147 = vsel %vm145, %v99, %v146
    %vm148 = vcmp.ge.f32.partialorder %v117, 0.0
    %v149 = vmul.f32 %v117, 0.01
    %v150 = vsel %vm148, %v117, %v149
    %vm151 = vcmp.ge.f32.partialorder %v135, 0.0
    %v152 = vmul.f32 %v135, 0.01
    %v153 = vsel %vm151, %v135, %v152
    %s154 = sld [smem:[#allocation2 + $0x18]]
    %v155 = vstv %s154
    %v156 = vmul.f32 %v155, %v138
    %s157 = sld [smem:[#allocation2 + $0x19]]
    %v158 = vstv %s157
    %v159 = vmul.f32 %v158, %v141
    %v160 = vadd.f32 %v156, %v159
    %s161 = sld [smem:[#allocation2 + $0x1a]]
    %v162 = vstv %s161
    %v163 = vmul.f32 %v162, %v144
    %v164 = vadd.f32 %v160, %v163
    %s165 = sld [smem:[#allocation2 + $0x1b]]
    %v166 = vstv %s165
    %v167 = vmul.f32 %v166, %v147
    %v168 = vadd.f32 %v164, %v167
    %s169 = sld [smem:[#allocation2 + $0x1c]]
    %v170 = vstv %s169
    %v171 = vmul.f32 %v170, %v150
    %v172 = vadd.f32 %v168, %v171
    %s173 = sld [smem:[#allocation2 + $0x1d]]
    %v174 = vstv %s173
    %v175 = vmul.f32 %v174, %v153
    %v176 = vadd.f32 %v172, %v175
    %s177 = sld [smem:[#allocation2 + $0x86]]
    %v178 = vstv %s177
    %v179 = vadd.f32 %v176, %v178
    %s180 = sld [smem:[#allocation2 + $0x1e]]
    %v181 = vstv %s180
    %v182 = vmul.f32 %v181, %v138
    %s183 = sld [smem:[#allocation2 + $0x1f]]
    %v184 = vstv %s183
    %v185 = vmul.f32 %v184, %v141
    %v186 = vadd.f32 %v182, %v185
    %s187 = sld [smem:[#allocation2 + $0x20]]
    %v188 = vstv %s187
    %v189 = vmul.f32 %v188, %v144
    %v190 = vadd.f32 %v186, %v189
    %s191 = sld [smem:[#allocation2 + $0x21]]
    %v192 = vstv %s191
    %v193 = vmul.f32 %v192, %v147
    %v194 = vadd.f32 %v190, %v193
    %s195 = sld [smem:[#allocation2 + $0x22]]
    %v196 = vstv %s195
    %v197 = vmul.f32 %v196, %v150
    %v198 = vadd.f32 %v194, %v197
    %s199 = sld [smem:[#allocation2 + $0x23]]
    %v200 = vstv %s199
    %v201 = vmul.f32 %v200, %v153
    %v202 = vadd.f32 %v198, %v201
    %s203 = sld [smem:[#allocation2 + $0x87]]
    %v204 = vstv %s203
    %v205 = vadd.f32 %v202, %v204
    %s206 = sld [smem:[#allocation2 + $0x24]]
    %v207 = vstv %s206
    %v208 = vmul.f32 %v207, %v138
    %s209 = sld [smem:[#allocation2 + $0x25]]
    %v210 = vstv %s209
    %v211 = vmul.f32 %v210, %v141
    %v212 = vadd.f32 %v208, %v211
    %s213 = sld [smem:[#allocation2 + $0x26]]
    %v214 = vstv %s213
    %v215 = vmul.f32 %v214, %v144
    %v216 = vadd.f32 %v212, %v215
    %s217 = sld [smem:[#allocation2 + $0x27]]
    %v218 = vstv %s217
    %v219 = vmul.f32 %v218, %v147
    %v220 = vadd.f32 %v216, %v219
    %s221 = sld [smem:[#allocation2 + $0x28]]
    %v222 = vstv %s221
    %v223 = vmul.f32 %v222, %v150
    %v224 = vadd.f32 %v220, %v223
    %s225 = sld [smem:[#allocation2 + $0x29]]
    %v226 = vstv %s225
    %v227 = vmul.f32 %v226, %v153
    %v228 = vadd.f32 %v224, %v227
    %s229 = sld [smem:[#allocation2 + $0x88]]
    %v230 = vstv %s229
    %v231 = vadd.f32 %v228, %v230
    %s232 = sld [smem:[#allocation2 + $0x2a]]
    %v233 = vstv %s232
    %v234 = vmul.f32 %v233, %v138
    %s235 = sld [smem:[#allocation2 + $0x2b]]
    %v236 = vstv %s235
    %v237 = vmul.f32 %v236, %v141
    %v238 = vadd.f32 %v234, %v237
    %s239 = sld [smem:[#allocation2 + $0x2c]]
    %v240 = vstv %s239
    %v241 = vmul.f32 %v240, %v144
    %v242 = vadd.f32 %v238, %v241
    %s243 = sld [smem:[#allocation2 + $0x2d]]
    %v244 = vstv %s243
    %v245 = vmul.f32 %v244, %v147
    %v246 = vadd.f32 %v242, %v245
    %s247 = sld [smem:[#allocation2 + $0x2e]]
    %v248 = vstv %s247
    %v249 = vmul.f32 %v248, %v150
    %v250 = vadd.f32 %v246, %v249
    %s251 = sld [smem:[#allocation2 + $0x2f]]
    %v252 = vstv %s251
    %v253 = vmul.f32 %v252, %v153
    %v254 = vadd.f32 %v250, %v253
    %s255 = sld [smem:[#allocation2 + $0x89]]
    %v256 = vstv %s255
    %v257 = vadd.f32 %v254, %v256
    %s258 = sld [smem:[#allocation2 + $0x30]]
    %v259 = vstv %s258
    %v260 = vmul.f32 %v259, %v138
    %s261 = sld [smem:[#allocation2 + $0x31]]
    %v262 = vstv %s261
    %v263 = vmul.f32 %v262, %v141
    %v264 = vadd.f32 %v260, %v263
    %s265 = sld [smem:[#allocation2 + $0x32]]
    %v266 = vstv %s265
    %v267 = vmul.f32 %v266, %v144
    %v268 = vadd.f32 %v264, %v267
    %s269 = sld [smem:[#allocation2 + $0x33]]
    %v270 = vstv %s269
    %v271 = vmul.f32 %v270, %v147
    %v272 = vadd.f32 %v268, %v271
    %s273 = sld [smem:[#allocation2 + $0x34]]
    %v274 = vstv %s273
    %v275 = vmul.f32 %v274, %v150
    %v276 = vadd.f32 %v272, %v275
    %s277 = sld [smem:[#allocation2 + $0x35]]
    %v278 = vstv %s277
    %v279 = vmul.f32 %v278, %v153
    %v280 = vadd.f32 %v276, %v279
    %s281 = sld [smem:[#allocation2 + $0x8a]]
    %v282 = vstv %s281
    %v283 = vadd.f32 %v280, %v282
    %s284 = sld [smem:[#allocation2 + $0x36]]
    %v285 = vstv %s284
    %v286 = vmul.f32 %v285, %v138
    %s287 = sld [smem:[#allocation2 + $0x37]]
    %v288 = vstv %s287
    %v289 = vmul.f32 %v288, %v141
    %v290 = vadd.f32 %v286, %v289
    %s291 = sld [smem:[#allocation2 + $0x38]]
    %v292 = vstv %s291
    %v293 = vmul.f32 %v292, %v144
    %v294 = vadd.f32 %v290, %v293
    %s295 = sld [smem:[#allocation2 + $0x39]]
    %v296 = vstv %s295
    %v297 = vmul.f32 %v296, %v147
    %v298 = vadd.f32 %v294, %v297
    %s299 = sld [smem:[#allocation2 + $0x3a]]
    %v300 = vstv %s299
    %v301 = vmul.f32 %v300, %v150
    %v302 = vadd.f32 %v298, %v301
    %s303 = sld [smem:[#allocation2 + $0x3b]]
    %v304 = vstv %s303
    %v305 = vmul.f32 %v304, %v153
    %v306 = vadd.f32 %v302, %v305
    %s307 = sld [smem:[#allocation2 + $0x8b]]
    %v308 = vstv %s307
    %v309 = vadd.f32 %v306, %v308
    %s310 = sld [smem:[#allocation2 + $0x3c]]
    %v311 = vstv %s310
    %v312 = vmul.f32 %v311, %v138
    %s313 = sld [smem:[#allocation2 + $0x3d]]
    %v314 = vstv %s313
    %v315 = vmul.f32 %v314, %v141
    %v316 = vadd.f32 %v312, %v315
    %s317 = sld [smem:[#allocation2 + $0x3e]]
    %v318 = vstv %s317
    %v319 = vmul.f32 %v318, %v144
    %v320 = vadd.f32 %v316, %v319
    %s321 = sld [smem:[#allocation2 + $0x3f]]
    %v322 = vstv %s321
    %v323 = vmul.f32 %v322, %v147
    %v324 = vadd.f32 %v320, %v323
    %s325 = sld [smem:[#allocation2 + $0x40]]
    %v326 = vstv %s325
    %v327 = vmul.f32 %v326, %v150
    %v328 = vadd.f32 %v324, %v327
    %s329 = sld [smem:[#allocation2 + $0x41]]
    %v330 = vstv %s329
    %v331 = vmul.f32 %v330, %v153
    %v332 = vadd.f32 %v328, %v331
    %s333 = sld [smem:[#allocation2 + $0x8c]]
    %v334 = vstv %s333
    %v335 = vadd.f32 %v332, %v334
    %s336 = sld [smem:[#allocation2 + $0x42]]
    %v337 = vstv %s336
    %v338 = vmul.f32 %v337, %v138
    %s339 = sld [smem:[#allocation2 + $0x43]]
    %v340 = vstv %s339
    %v341 = vmul.f32 %v340, %v141
    %v342 = vadd.f32 %v338, %v341
    %s343 = sld [smem:[#allocation2 + $0x44]]
    %v344 = vstv %s343
    %v345 = vmul.f32 %v344, %v144
    %v346 = vadd.f32 %v342, %v345
    %s347 = sld [smem:[#allocation2 + $0x45]]
    %v348 = vstv %s347
    %v349 = vmul.f32 %v348, %v147
    %v350 = vadd.f32 %v346, %v349
    %s351 = sld [smem:[#allocation2 + $0x46]]
    %v352 = vstv %s351
    %v353 = vmul.f32 %v352, %v150
    %v354 = vadd.f32 %v350, %v353
    %s355 = sld [smem:[#allocation2 + $0x47]]
    %v356 = vstv %s355
    %v357 = vmul.f32 %v356, %v153
    %v358 = vadd.f32 %v354, %v357
    %s359 = sld [smem:[#allocation2 + $0x8d]]
    %v360 = vstv %s359
    %v361 = vadd.f32 %v358, %v360
    %v362 = vtanh.pop %v179
    %v363 = vtanh.pop %v205
    %v364 = vtanh.pop %v231
    %v365 = vtanh.pop %v257
    %v366 = vtanh.pop %v283
    %v367 = vtanh.pop %v309
    %v368 = vtanh.pop %v335
    %v369 = vtanh.pop %v361
    %s370 = sld [smem:[#allocation2 + $0x48]]
    %v371 = vstv %s370
    %v372 = vmul.f32 %v371, %v362
    %s373 = sld [smem:[#allocation2 + $0x49]]
    %v374 = vstv %s373
    %v375 = vmul.f32 %v374, %v363
    %v376 = vadd.f32 %v372, %v375
    %s377 = sld [smem:[#allocation2 + $0x4a]]
    %v378 = vstv %s377
    %v379 = vmul.f32 %v378, %v364
    %v380 = vadd.f32 %v376, %v379
    %s381 = sld [smem:[#allocation2 + $0x4b]]
    %v382 = vstv %s381
    %v383 = vmul.f32 %v382, %v365
    %v384 = vadd.f32 %v380, %v383
    %s385 = sld [smem:[#allocation2 + $0x4c]]
    %v386 = vstv %s385
    %v387 = vmul.f32 %v386, %v366
    %v388 = vadd.f32 %v384, %v387
    %s389 = sld [smem:[#allocation2 + $0x4d]]
    %v390 = vstv %s389
    %v391 = vmul.f32 %v390, %v367
    %v392 = vadd.f32 %v388, %v391
    %s393 = sld [smem:[#allocation2 + $0x4e]]
    %v394 = vstv %s393
    %v395 = vmul.f32 %v394, %v368
    %v396 = vadd.f32 %v392, %v395
    %s397 = sld [smem:[#allocation2 + $0x4f]]
    %v398 = vstv %s397
    %v399 = vmul.f32 %v398, %v369
    %v400 = vadd.f32 %v396, %v399
    %s401 = sld [smem:[#allocation2 + $0x8e]]
    %v402 = vstv %s401
    %v403 = vadd.f32 %v400, %v402
    %s404 = sld [smem:[#allocation2 + $0x50]]
    %v405 = vstv %s404
    %v406 = vmul.f32 %v405, %v362
    %s407 = sld [smem:[#allocation2 + $0x51]]
    %v408 = vstv %s407
    %v409 = vmul.f32 %v408, %v363
    %v410 = vadd.f32 %v406, %v409
    %s411 = sld [smem:[#allocation2 + $0x52]]
    %v412 = vstv %s411
    %v413 = vmul.f32 %v412, %v364
    %v414 = vadd.f32 %v410, %v413
    %s415 = sld [smem:[#allocation2 + $0x53]]
    %v416 = vstv %s415
    %v417 = vmul.f32 %v416, %v365
    %v418 = vadd.f32 %v414, %v417
    %s419 = sld [smem:[#allocation2 + $0x54]]
    %v420 = vstv %s419
    %v421 = vmul.f32 %v420, %v366
    %v422 = vadd.f32 %v418, %v421
    %s423 = sld [smem:[#allocation2 + $0x55]]
    %v424 = vstv %s423
    %v425 = vmul.f32 %v424, %v367
    %v426 = vadd.f32 %v422, %v425
    %s427 = sld [smem:[#allocation2 + $0x56]]
    %v428 = vstv %s427
    %v429 = vmul.f32 %v428, %v368
    %v430 = vadd.f32 %v426, %v429
    %s431 = sld [smem:[#allocation2 + $0x57]]
    %v432 = vstv %s431
    %v433 = vmul.f32 %v432, %v369
    %v434 = vadd.f32 %v430, %v433
    %s435 = sld [smem:[#allocation2 + $0x8f]]
    %v436 = vstv %s435
    %v437 = vadd.f32 %v434, %v436
    %s438 = sld [smem:[#allocation2 + $0x58]]
    %v439 = vstv %s438
    %v440 = vmul.f32 %v439, %v362
    %s441 = sld [smem:[#allocation2 + $0x59]]
    %v442 = vstv %s441
    %v443 = vmul.f32 %v442, %v363
    %v444 = vadd.f32 %v440, %v443
    %s445 = sld [smem:[#allocation2 + $0x5a]]
    %v446 = vstv %s445
    %v447 = vmul.f32 %v446, %v364
    %v448 = vadd.f32 %v444, %v447
    %s449 = sld [smem:[#allocation2 + $0x5b]]
    %v450 = vstv %s449
    %v451 = vmul.f32 %v450, %v365
    %v452 = vadd.f32 %v448, %v451
    %s453 = sld [smem:[#allocation2 + $0x5c]]
    %v454 = vstv %s453
    %v455 = vmul.f32 %v454, %v366
    %v456 = vadd.f32 %v452, %v455
    %s457 = sld [smem:[#allocation2 + $0x5d]]
    %v458 = vstv %s457
    %v459 = vmul.f32 %v458, %v367
    %v460 = vadd.f32 %v456, %v459
    %s461 = sld [smem:[#allocation2 + $0x5e]]
    %v462 = vstv %s461
    %v463 = vmul.f32 %v462, %v368
    %v464 = vadd.f32 %v460, %v463
    %s465 = sld [smem:[#allocation2 + $0x5f]]
    %v466 = vstv %s465
    %v467 = vmul.f32 %v466, %v369
    %v468 = vadd.f32 %v464, %v467
    %s469 = sld [smem:[#allocation2 + $0x90]]
    %v470 = vstv %s469
    %v471 = vadd.f32 %v468, %v470
    %s472 = sld [smem:[#allocation2 + $0x60]]
    %v473 = vstv %s472
    %v474 = vmul.f32 %v473, %v362
    %s475 = sld [smem:[#allocation2 + $0x61]]
    %v476 = vstv %s475
    %v477 = vmul.f32 %v476, %v363
    %v478 = vadd.f32 %v474, %v477
    %s479 = sld [smem:[#allocation2 + $0x62]]
    %v480 = vstv %s479
    %v481 = vmul.f32 %v480, %v364
    %v482 = vadd.f32 %v478, %v481
    %s483 = sld [smem:[#allocation2 + $0x63]]
    %v484 = vstv %s483
    %v485 = vmul.f32 %v484, %v365
    %v486 = vadd.f32 %v482, %v485
    %s487 = sld [smem:[#allocation2 + $0x64]]
    %v488 = vstv %s487
    %v489 = vmul.f32 %v488, %v366
    %v490 = vadd.f32 %v486, %v489
    %s491 = sld [smem:[#allocation2 + $0x65]]
    %v492 = vstv %s491
    %v493 = vmul.f32 %v492, %v367
    %v494 = vadd.f32 %v490, %v493
    %s495 = sld [smem:[#allocation2 + $0x66]]
    %v496 = vstv %s495
    %v497 = vmul.f32 %v496, %v368
    %v498 = vadd.f32 %v494, %v497
    %s499 = sld [smem:[#allocation2 + $0x67]]
    %v500 = vstv %s499
    %v501 = vmul.f32 %v500, %v369
    %v502 = vadd.f32 %v498, %v501
    %s503 = sld [smem:[#allocation2 + $0x91]]
    %v504 = vstv %s503
    %v505 = vadd.f32 %v502, %v504
    %v506 = vxor.u32 %v403, 2147483648
    %v507 = vmul.f32 %v506, 1.442695
    %v508 = vpow.pop %v507
    %v509 = vadd.f32 %v508, 1.0
    %v510 = vrcp.pop %v509
    %v511 = vmul.f32 1.0, %v510
    %v512 = vxor.u32 %v437, 2147483648
    %v513 = vmul.f32 %v512, 1.442695
    %v514 = vpow.pop %v513
    %v515 = vadd.f32 %v514, 1.0
    %v516 = vrcp.pop %v515
    %v517 = vmul.f32 1.0, %v516
    %v518 = vxor.u32 %v471, 2147483648
    %v519 = vmul.f32 %v518, 1.442695
    %v520 = vpow.pop %v519
    %v521 = vadd.f32 %v520, 1.0
    %v522 = vrcp.pop %v521
    %v523 = vmul.f32 1.0, %v522
    %v524 = vxor.u32 %v505, 2147483648
    %v525 = vmul.f32 %v524, 1.442695
    %v526 = vpow.pop %v525
    %v527 = vadd.f32 %v526, 1.0
    %v528 = vrcp.pop %v527
    %v529 = vmul.f32 1.0, %v528
    %s530 = sld [smem:[#allocation2 + $0x68]]
    %v531 = vstv %s530
    %v532 = vmul.f32 %v531, %v511
    %s533 = sld [smem:[#allocation2 + $0x69]]
    %v534 = vstv %s533
    %v535 = vmul.f32 %v534, %v517
    %v536 = vadd.f32 %v532, %v535
    %s537 = sld [smem:[#allocation2 + $0x6a]]
    %v538 = vstv %s537
    %v539 = vmul.f32 %v538, %v523
    %v540 = vadd.f32 %v536, %v539
    %s541 = sld [smem:[#allocation2 + $0x6b]]
    %v542 = vstv %s541
    %v543 = vmul.f32 %v542, %v529
    %v544 = vadd.f32 %v540, %v543
    %s545 = sld [smem:[#allocation2 + $0x92]]
    %v546 = vstv %s545
    %v547 = vadd.f32 %v544, %v546
    %s548 = sld [smem:[#allocation2 + $0x6c]]
    %v549 = vstv %s548
    %v550 = vmul.f32 %v549, %v511
    %s551 = sld [smem:[#allocation2 + $0x6d]]
    %v552 = vstv %s551
    %v553 = vmul.f32 %v552, %v517
    %v554 = vadd.f32 %v550, %v553
    %s555 = sld [smem:[#allocation2 + $0x6e]]
    %v556 = vstv %s555
    %v557 = vmul.f32 %v556, %v523
    %v558 = vadd.f32 %v554, %v557
    %s559 = sld [smem:[#allocation2 + $0x6f]]
    %v560 = vstv %s559
    %v561 = vmul.f32 %v560, %v529
    %v562 = vadd.f32 %v558, %v561
    %s563 = sld [smem:[#allocation2 + $0x93]]
    %v564 = vstv %s563
    %v565 = vadd.f32 %v562, %v564
    %s566 = sld [smem:[#allocation2 + $0x70]]
    %v567 = vstv %s566
    %v568 = vmul.f32 %v567, %v511
    %s569 = sld [smem:[#allocation2 + $0x71]]
    %v570 = vstv %s569
    %v571 = vmul.f32 %v570, %v517
    %v572 = vadd.f32 %v568, %v571
    %s573 = sld [smem:[#allocation2 + $0x72]]
    %v574 = vstv %s573
    %v575 = vmul.f32 %v574, %v523
    %v576 = vadd.f32 %v572, %v575
    %s577 = sld [smem:[#allocation2 + $0x73]]
    %v578 = vstv %s577
    %v579 = vmul.f32 %v578, %v529
    %v580 = vadd.f32 %v576, %v579
    %s581 = sld [smem:[#allocation2 + $0x94]]
    %v582 = vstv %s581
    %v583 = vadd.f32 %v580, %v582
    %s584 = sld [smem:[#allocation2 + $0x74]]
    %v585 = vstv %s584
    %v586 = vmul.f32 %v585, %v511
    %s587 = sld [smem:[#allocation2 + $0x75]]
    %v588 = vstv %s587
    %v589 = vmul.f32 %v588, %v517
    %v590 = vadd.f32 %v586, %v589
    %s591 = sld [smem:[#allocation2 + $0x76]]
    %v592 = vstv %s591
    %v593 = vmul.f32 %v592, %v523
    %v594 = vadd.f32 %v590, %v593
    %s595 = sld [smem:[#allocation2 + $0x77]]
    %v596 = vstv %s595
    %v597 = vmul.f32 %v596, %v529
    %v598 = vadd.f32 %v594, %v597
    %s599 = sld [smem:[#allocation2 + $0x95]]
    %v600 = vstv %s599
    %v601 = vadd.f32 %v598, %v600
    %vm602 = vcmp.gt.f32.partialorder %v547, 0.0
    %v603 = vmul.f32 %v547, 1.442695
    %v604 = vpow.pop %v603
    %v605 = vsub.f32 %v604, 1.0
    %v606 = vsel %vm602, %v547, %v605
    %vm607 = vcmp.gt.f32.partialorder %v565, 0.0
    %v608 = vmul.f32 %v565, 1.442695
    %v609 = vpow.pop %v608
    %v610 = vsub.f32 %v609, 1.0
    %v611 = vsel %vm607, %v565, %v610
    %vm612 = vcmp.gt.f32.partialorder %v583, 0.0
    %v613 = vmul.f32 %v583, 1.442695
    %v614 = vpow.pop %v613
    %v615 = vsub.f32 %v614, 1.0
    %v616 = vsel %vm612, %v583, %v615
    %vm617 = vcmp.gt.f32.partialorder %v601, 0.0
    %v618 = vmul.f32 %v601, 1.442695
    %v619 = vpow.pop %v618
    %v620 = vsub.f32 %v619, 1.0
    %v621 = vsel %vm617, %v601, %v620
    %s622 = sld [smem:[#allocation2 + $0x78]]
    %v623 = vstv %s622
    %v624 = vmul.f32 %v623, %v606
    %s625 = sld [smem:[#allocation2 + $0x79]]
    %v626 = vstv %s625
    %v627 = vmul.f32 %v626, %v611
    %v628 = vadd.f32 %v624, %v627
    %s629 = sld [smem:[#allocation2 + $0x7a]]
    %v630 = vstv %s629
    %v631 = vmul.f32 %v630, %v616
    %v632 = vadd.f32 %v628, %v631
    %s633 = sld [smem:[#allocation2 + $0x7b]]
    %v634 = vstv %s633
    %v635 = vmul.f32 %v634, %v621
    %v636 = vadd.f32 %v632, %v635
    %s637 = sld [smem:[#allocation2 + $0x96]]
    %v638 = vstv %s637
    %v639 = vadd.f32 %v636, %v638
    %s640 = sld [smem:[#allocation2 + $0x7c]]
    %v641 = vstv %s640
    %v642 = vmul.f32 %v641, %v606
    %s643 = sld [smem:[#allocation2 + $0x7d]]
    %v644 = vstv %s643
    %v645 = vmul.f32 %v644, %v611
    %v646 = vadd.f32 %v642, %v645
    %s647 = sld [smem:[#allocation2 + $0x7e]]
    %v648 = vstv %s647
    %v649 = vmul.f32 %v648, %v616
    %v650 = vadd.f32 %v646, %v649
    %s651 = sld [smem:[#allocation2 + $0x7f]]
    %v652 = vstv %s651
    %v653 = vmul.f32 %v652, %v621
    %v654 = vadd.f32 %v650, %v653
    %s655 = sld [smem:[#allocation2 + $0x97]]
    %v656 = vstv %s655
    %v657 = vadd.f32 %v654, %v656
    %v658 = vmax.f32 %v639, %v657
    %v659 = vsub.f32 %v639, %v658
    %v660 = vmul.f32 %v659, 1.442695
    %v661 = vpow.pop %v660
    %v662 = vsub.f32 %v657, %v658
    %v663 = vmul.f32 %v662, 1.442695
    %v664 = vpow.pop %v663
    %v665 = vadd.f32 %v661, %v664
    %v666 = vrcp.pop %v665
    %v667 = vmul.f32 1.0, %v666
    %v668 = vmul.f32 %v661, %v667
    %669 = vst [vmem:[%s2] sm:$0x1] %v668
    %v670 = vmul.f32 %v664, %v667
    %671 = vst [vmem:[%s2 + $0x1] sm:$0x1] %v670
    // Predicated region
    $region14: #{simple_nn_forward.1} parent=1 // pred_check
      _
    $region15: #{simple_nn_forward.1} parent=1 // pred_check_branch
      %673 = sbr.rel (0) target = $region17
    $region16: #{simple_nn_forward.1} parent=1 // pred_region
      _
    $region17: #{simple_nn_forward.1} parent=1 // pred_fallthru
      _
    // Predicated region
    $region18: #{simple_nn_forward.1} parent=1 // pred_check
      _
    $region19: #{simple_nn_forward.1} parent=1 // pred_check_branch
      %675 = sbr.rel (0) target = $region21
    $region20: #{simple_nn_forward.1} parent=1 // pred_region
      _
    $region21: #{simple_nn_forward.1} parent=1 // pred_fallthru
      _
    %676 = vsyncpa [#allocation3], 1

</llo_original>
